<compile_context>
chip_gen: v5e
topology: v5e:2x2
jax: 0.10.0
libtpu: 0.0.40
codegen_flags: <defaults>
</compile_context>

<pallas_src>
import functools

import jax
import jax.numpy as jnp
import numpy as np
from jax.experimental import pallas as pl
from jax.experimental.pallas import tpu as pltpu

D_MODEL = 32
N_HEADS = 4
D_HEAD = D_MODEL // N_HEADS
D_FF = 64
LN_EPS = 1e-5
NEG_INF = -1e9

# ---- column layout of the packed weight slab (every block has D_MODEL rows) --
C_SELF_QKV = 0                         # (D, 3D)  self-attn Q|K|V (Q pre-scaled)
C_SELF_O = C_SELF_QKV + 3 * D_MODEL    # (D, D)
C_CROSS_Q = C_SELF_O + D_MODEL         # (D, D)   (pre-scaled)
C_CROSS_KV = C_CROSS_Q + D_MODEL       # (D, 2D)
C_CROSS_O = C_CROSS_KV + 2 * D_MODEL   # (D, D)
C_FF1 = C_CROSS_O + D_MODEL            # (D, D_FF)
W_COLS = C_FF1 + D_FF                  # = 320

# ---- row layout of the packed bias / LayerNorm slab (width 3*D_MODEL = 96) ---
VEC_W = 3 * D_MODEL
(V_LN0_W, V_LN0_B, V_LN1_W, V_LN1_B, V_LN2_W, V_LN2_B,
 V_B_SELF_QKV, V_B_SELF_O, V_B_CROSS_Q, V_B_CROSS_KV, V_B_CROSS_O,
 V_B_FF1, V_B_FF2) = range(13)
N_VEC_ROWS = 13


# ------------------------------ kernel helpers --------------------------------

def _iota_f32(shape, dim):
    return jax.lax.broadcasted_iota(jnp.int32, shape, dim).astype(jnp.float32)


def _floordiv(x, d):
    """floor(x / d) for f32 tensors holding small non-negative integers.
    The +0.5 margin makes the result robust to the inexact f32 multiply."""
    return jnp.floor((x + 0.5) * (1.0 / float(d)))


def _layernorm(x, w, b):
    mu = jnp.mean(x, axis=-1, keepdims=True)
    var = jnp.mean((x - mu) ** 2, axis=-1, keepdims=True)
    return (x - mu) * jax.lax.rsqrt(var + LN_EPS) * w + b


def _head_lane_mask(rows_q):
    """(N_HEADS*rows_q, D) 0/1 mask: row block h keeps only head h's lanes."""
    hq = N_HEADS * rows_q
    hrow = _floordiv(_iota_f32((hq, D_MODEL), 0), rows_q)
    hcol = _floordiv(_iota_f32((hq, D_MODEL), 1), D_HEAD)
    return jnp.where(hrow == hcol, 1.0, 0.0)


def _flat_additive_mask(cm01, b, sq, sk):
    """Compact (b*sq, sk) 0/1 mask -> (N_HEADS*b*sq, b*sk) additive mask.

    Built in-kernel: an iota-based batch gate (block-diagonal over batch) is
    combined with the compact mask replicated into every key-batch block via a
    tiny one-hot expansion dot.  Result is tiled over heads along sublanes so
    it matches the head-stacked score layout."""
    rq, rkf = b * sq, b * sk
    same_b = (_floordiv(_iota_f32((rq, rkf), 0), sq) ==
              _floordiv(_iota_f32((rq, rkf), 1), sk))
    # expand[s, c] = 1 iff (c mod sk) == s  -> val[r, b'*sk + s] = cm01[r, s]
    ci = _iota_f32((sk, rkf), 1)
    cmod = ci - sk * _floordiv(ci, sk)
    expand = jnp.where(cmod == _iota_f32((sk, rkf), 0), 1.0, 0.0)
    val = jnp.dot(cm01, expand, preferred_element_type=jnp.float32)
    add = jnp.where(jnp.logical_and(same_b, val > 0.5), 0.0, NEG_INF)
    return jnp.concatenate([add] * N_HEADS, axis=0)


def _mha(q, k, v, mask_h, head_mask, wo, bo):
    """Multi-head attention, all heads in 3 full-width MXU dots.

    q/k/v: (rows, D) flat slabs (q already carries bias and 1/sqrt(d_head)).
    mask_h: (N_HEADS*rows_q, rows_k) additive mask (block-diag over batch,
    tiled over heads).  head_mask: (N_HEADS*rows_q, D) head lane selector.
    Heads are re-"concatenated" by summing the 4 head-masked row blocks."""
    rq = q.shape[0]
    qm = jnp.concatenate([q] * N_HEADS, axis=0) * head_mask        # (H*rq, D)
    s = jnp.dot(qm, k.T, preferred_element_type=jnp.float32) + mask_h
    s = s - jnp.max(s, axis=-1, keepdims=True)
    e = jnp.exp(s)
    denom = jnp.sum(e, axis=-1, keepdims=True)
    r = pl.reciprocal(denom, approx=True)      # EUP slot
    r = r * (2.0 - denom * r)                  # 1 Newton step -> f32 accuracy
    p = e * r
    ctx = jnp.dot(p, v, preferred_element_type=jnp.float32) * head_mask
    cat = ctx[0:rq]
    for h in range(1, N_HEADS):                # concat-heads == masked block sum
        cat = cat + ctx[h * rq:(h + 1) * rq]
    return jnp.dot(cat, wo, preferred_element_type=jnp.float32) + bo


# ------------------------------ fused layer kernel ----------------------------

def _decoder_layer_kernel(x_ref, mem_ref, tmask_ref, smask_ref,
                          w_ref, wff2_ref, vec_ref, o_ref, *, B, St, Ss):
    x = x_ref[...]            # (B*St, D)
    mem = mem_ref[...]        # (B*Ss, D)
    w = w_ref[...]            # (D, 320) packed weight slab
    vecs = vec_ref[...]       # (13, 96) packed biases + LN params

    D = D_MODEL
    rows_q = B * St

    head_mask = _head_lane_mask(rows_q)                          # (4*16, 32)
    self_mask = _flat_additive_mask(tmask_ref[...], B, St, St)   # (4*16, B*St)
    cross_mask = _flat_additive_mask(smask_ref[...], B, St, Ss)  # (4*16, B*Ss)

    # ---- sublayer 0: x + self_attn(LN(x)) -----------------------------------
    xn = _layernorm(x, vecs[V_LN0_W, :D], vecs[V_LN0_B, :D])
    qkv = jnp.dot(xn, w[:, C_SELF_QKV:C_SELF_QKV + 3 * D],
                  preferred_element_type=jnp.float32) + vecs[V_B_SELF_QKV]
    q, k, v = qkv[:, :D], qkv[:, D:2 * D], qkv[:, 2 * D:3 * D]
    x = x + _mha(q, k, v, self_mask, head_mask,
                 w[:, C_SELF_O:C_SELF_O + D], vecs[V_B_SELF_O, :D])

    # ---- sublayer 1: x + cross_attn(LN(x), memory) ---------------------------
    xn = _layernorm(x, vecs[V_LN1_W, :D], vecs[V_LN1_B, :D])
    q = jnp.dot(xn, w[:, C_CROSS_Q:C_CROSS_Q + D],
                preferred_element_type=jnp.float32) + vecs[V_B_CROSS_Q, :D]
    kv = jnp.dot(mem, w[:, C_CROSS_KV:C_CROSS_KV + 2 * D],
                 preferred_element_type=jnp.float32) + vecs[V_B_CROSS_KV, :2 * D]
    k, v = kv[:, :D], kv[:, D:2 * D]
    x = x + _mha(q, k, v, cross_mask, head_mask,
                 w[:, C_CROSS_O:C_CROSS_O + D], vecs[V_B_CROSS_O, :D])

    # ---- sublayer 2: x + FFN(LN(x)) ------------------------------------------
    xn = _layernorm(x, vecs[V_LN2_W, :D], vecs[V_LN2_B, :D])
    h = jnp.dot(xn, w[:, C_FF1:C_FF1 + D_FF],
                preferred_element_type=jnp.float32) + vecs[V_B_FF1, :D_FF]
    h = jnp.maximum(h, 0.0)
    y = jnp.dot(h, wff2_ref[...],
                preferred_element_type=jnp.float32) + vecs[V_B_FF2, :D]

    # TODO(synk): dropout is stochastic; eval-mode identity is used here.
    o_ref[...] = x + y


# ------------------------------ wrapper ---------------------------------------

def _pack_params(p):
    """Fold the softmax scale into Wq/bq and pack operands into 3 slabs."""
    scale = 1.0 / np.sqrt(D_HEAD)
    sa, ca, ff = p["self_attn"], p["cross_attn"], p["ffn"]

    w_slab = jnp.concatenate(
        [sa["wq"] * scale, sa["wk"], sa["wv"],          # self QKV (pre-scaled Q)
         sa["wo"],
         ca["wq"] * scale,                              # cross Q (pre-scaled)
         ca["wk"], ca["wv"],                            # cross KV
         ca["wo"],
         ff["w1"]], axis=1)                             # (D, 320)
    w_ff2 = ff["w2"]                                    # (D_FF, D)

    def row(vec):
        v = jnp.reshape(vec, (-1,)).astype(jnp.float32)
        return jnp.pad(v, (0, VEC_W - v.shape[0]))

    vec_slab = jnp.stack([
        row(p["ln0_w"]), row(p["ln0_b"]),
        row(p["ln1_w"]), row(p["ln1_b"]),
        row(p["ln2_w"]), row(p["ln2_b"]),
        row(jnp.concatenate([sa["bq"].ravel() * scale,
                             sa["bk"].ravel(), sa["bv"].ravel()])),
        row(sa["bo"]),
        row(ca["bq"].ravel() * scale),
        row(jnp.concatenate([ca["bk"].ravel(), ca["bv"].ravel()])),
        row(ca["bo"]),
        row(ff["b1"]),
        row(ff["b2"]),
    ], axis=0)                                          # (13, 96)
    return w_slab, w_ff2, vec_slab


def decoder_layer(params, x, memory, src_mask, tgt_mask):
    """x + sublayer pattern exactly as DecoderLayer.forward (eval mode)."""
    B, St, D = x.shape
    Ss = memory.shape[1]

    x2d = x.reshape(B * St, D)
    mem2d = memory.reshape(B * Ss, D)
    # Compact 0/1 masks only (O(B*S*Smax)); the block-diagonal additive masks
    # are rebuilt in-kernel from iota compares.
    tmask2d = tgt_mask.astype(jnp.float32).reshape(B * St, St)
    smask2d = src_mask.astype(jnp.float32).reshape(B * St, Ss)
    w_slab, w_ff2, vec_slab = _pack_params(params)

    vmem = pl.BlockSpec(memory_space=pltpu.MemorySpace.VMEM)
    out2d = pl.pallas_call(
        functools.partial(_decoder_layer_kernel, B=B, St=St, Ss=Ss),
        out_shape=jax.ShapeDtypeStruct((B * St, D), jnp.float32),
        in_specs=[vmem] * 7,
        out_specs=vmem,
    )(x2d, mem2d, tmask2d, smask2d, w_slab, w_ff2, vec_slab)
    return out2d.reshape(B, St, D)


# ------------------------------ parameter init --------------------------------

def _linear_init(key, fan_in, fan_out):
    kw, kb = jax.random.split(key)
    bound = 1.0 / np.sqrt(fan_in)
    w = jax.random.uniform(kw, (fan_in, fan_out), jnp.float32, -bound, bound)
    b = jax.random.uniform(kb, (1, fan_out), jnp.float32, -bound, bound)
    return w, b


def init_params(key):
    keys = jax.random.split(key, 16)

    def attn_params(ks):
        wq, bq = _linear_init(ks[0], D_MODEL, D_MODEL)
        wk, bk = _linear_init(ks[1], D_MODEL, D_MODEL)
        wv, bv = _linear_init(ks[2], D_MODEL, D_MODEL)
        wo, bo = _linear_init(ks[3], D_MODEL, D_MODEL)
        return dict(wq=wq, bq=bq, wk=wk, bk=bk, wv=wv, bv=bv, wo=wo, bo=bo)

    w1, b1 = _linear_init(keys[8], D_MODEL, D_FF)
    w2, b2 = _linear_init(keys[9], D_FF, D_MODEL)
    ones = jnp.ones((1, D_MODEL), jnp.float32)
    zeros = jnp.zeros((1, D_MODEL), jnp.float32)
    return dict(
        self_attn=attn_params(keys[0:4]),
        cross_attn=attn_params(keys[4:8]),
        ffn=dict(w1=w1, b1=b1, w2=w2, b2=b2),
        ln0_w=ones, ln0_b=zeros,
        ln1_w=ones, ln1_b=zeros,
        ln2_w=ones, ln2_b=zeros,
    )


# ------------------------------ pure-JAX reference ----------------------------

def _ref_ln(x, w, b):
    mu = x.mean(-1, keepdims=True)
    var = ((x - mu) ** 2).mean(-1, keepdims=True)
    return (x - mu) / jnp.sqrt(var + LN_EPS) * w + b


def _ref_mha(q_in, kv_in, mask, p):
    q = q_in @ p["wq"] + p["bq"]
    k = kv_in @ p["wk"] + p["bk"]
    v = kv_in @ p["wv"] + p["bv"]
    B, Sq, _ = q.shape
    Sk = k.shape[1]
    q = q.reshape(B, Sq, N_HEADS, D_HEAD).transpose(0, 2, 1, 3)
    k = k.reshape(B, Sk, N_HEADS, D_HEAD).transpose(0, 2, 1, 3)
    v = v.reshape(B, Sk, N_HEADS, D_HEAD).transpose(0, 2, 1, 3)
    s = jnp.einsum("bhqd,bhkd->bhqk", q, k) / np.sqrt(D_HEAD)
    s = jnp.where(mask[:, None] > 0, s, NEG_INF)
    a = jax.nn.softmax(s, axis=-1)
    ctx = jnp.einsum("bhqk,bhkd->bhqd", a, v).transpose(0, 2, 1, 3)
    ctx = ctx.reshape(B, Sq, D_MODEL)
    return ctx @ p["wo"] + p["bo"]


def ref_decoder_layer(params, x, memory, src_mask, tgt_mask):
    x1 = x + _ref_mha(_ref_ln(x, params["ln0_w"], params["ln0_b"]),
                      _ref_ln(x, params["ln0_w"], params["ln0_b"]),
                      tgt_mask, params["self_attn"])
    x2 = x1 + _ref_mha(_ref_ln(x1, params["ln1_w"], params["ln1_b"]),
                       memory, src_mask, params["cross_attn"])
    xn = _ref_ln(x2, params["ln2_w"], params["ln2_b"])
    h = jnp.maximum(xn @ params["ffn"]["w1"] + params["ffn"]["b1"], 0.0)
    return x2 + h @ params["ffn"]["w2"] + params["ffn"]["b2"]


# --------------------------------- main ----------------------------------------

if __name__ == "__main__":
    B, S_TGT, S_SRC = 2, 8, 12
    key = jax.random.PRNGKey(0)
    k_x, k_m, k_p = jax.random.split(key, 3)

    x = jax.random.normal(k_x, (B, S_TGT, D_MODEL), jnp.float32)
    memory = jax.random.normal(k_m, (B, S_SRC, D_MODEL), jnp.float32)

    # causal target mask (1 = attend), same for every batch element
    tgt_mask = jnp.broadcast_to(
        jnp.tril(jnp.ones((S_TGT, S_TGT), jnp.float32)), (B, S_TGT, S_TGT))
    # source mask: last 2 source positions of batch element 1 are padding
    src_mask_np = np.ones((B, S_TGT, S_SRC), np.float32)
    src_mask_np[1, :, -2:] = 0.0
    src_mask = jnp.asarray(src_mask_np)

    params = init_params(k_p)

    out = jax.jit(decoder_layer)(params, x, memory, src_mask, tgt_mask)
    out = jax.block_until_ready(out)

    ref = ref_decoder_layer(params, x, memory, src_mask, tgt_mask)
    np.testing.assert_allclose(np.asarray(out), np.asarray(ref),
                               rtol=1e-4, atol=1e-4)
    print("KERNEL_OK")
</pallas_src>

<mosaic_0001>
module attributes {stable_mosaic.version = 11 : i64} {
  func.func @_decoder_layer_kernel(%arg0: memref<16x32xf32, #tpu.memory_space<vmem>>, %arg1: memref<24x32xf32, #tpu.memory_space<vmem>>, %arg2: memref<16x8xf32, #tpu.memory_space<vmem>>, %arg3: memref<16x12xf32, #tpu.memory_space<vmem>>, %arg4: memref<32x320xf32, #tpu.memory_space<vmem>>, %arg5: memref<64x32xf32, #tpu.memory_space<vmem>>, %arg6: memref<13x96xf32, #tpu.memory_space<vmem>>, %arg7: memref<16x32xf32, #tpu.memory_space<vmem>>) attributes {dimension_semantics = [], scalar_prefetch = 0 : i64, scratch_operands = 0 : i64, tpu.core_type = #tpu.core_type<tc>} {
    %c0 = arith.constant 0 : index
    %c0_0 = arith.constant 0 : index
    %0 = vector.load %arg0[%c0, %c0_0] : memref<16x32xf32, #tpu.memory_space<vmem>>, vector<16x32xf32>
    %c0_1 = arith.constant 0 : index
    %c0_2 = arith.constant 0 : index
    %1 = vector.load %arg1[%c0_1, %c0_2] : memref<24x32xf32, #tpu.memory_space<vmem>>, vector<24x32xf32>
    %c0_3 = arith.constant 0 : index
    %c0_4 = arith.constant 0 : index
    %2 = vector.load %arg4[%c0_3, %c0_4] : memref<32x320xf32, #tpu.memory_space<vmem>>, vector<32x320xf32>
    %c0_5 = arith.constant 0 : index
    %c0_6 = arith.constant 0 : index
    %3 = vector.load %arg6[%c0_5, %c0_6] : memref<13x96xf32, #tpu.memory_space<vmem>>, vector<13x96xf32>
    %4 = tpu.iota {dimensions = array<i32: 0>} : vector<64x32xi32>
    %5 = arith.sitofp %4 : vector<64x32xi32> to vector<64x32xf32>
    %cst = arith.constant 5.000000e-01 : f32
    %6 = vector.broadcast %cst : f32 to vector<64x32xf32>
    %7 = arith.addf %5, %6 : vector<64x32xf32>
    %cst_7 = arith.constant 6.250000e-02 : f32
    %8 = vector.broadcast %cst_7 : f32 to vector<64x32xf32>
    %9 = arith.mulf %7, %8 : vector<64x32xf32>
    %10 = math.floor %9 : vector<64x32xf32>
    %11 = tpu.iota {dimensions = array<i32: 1>} : vector<64x32xi32>
    %12 = arith.sitofp %11 : vector<64x32xi32> to vector<64x32xf32>
    %cst_8 = arith.constant 5.000000e-01 : f32
    %13 = vector.broadcast %cst_8 : f32 to vector<64x32xf32>
    %14 = arith.addf %12, %13 : vector<64x32xf32>
    %cst_9 = arith.constant 1.250000e-01 : f32
    %15 = vector.broadcast %cst_9 : f32 to vector<64x32xf32>
    %16 = arith.mulf %14, %15 : vector<64x32xf32>
    %17 = math.floor %16 : vector<64x32xf32>
    %18 = arith.cmpf oeq, %10, %17 : vector<64x32xf32>
    %cst_10 = arith.constant 1.000000e+00 : f32
    %cst_11 = arith.constant 0.000000e+00 : f32
    %19 = vector.broadcast %cst_10 : f32 to vector<64x32xf32>
    %20 = vector.broadcast %cst_11 : f32 to vector<64x32xf32>
    %21 = arith.select %18, %19, %20 : vector<64x32xi1>, vector<64x32xf32>
    %c0_12 = arith.constant 0 : index
    %c0_13 = arith.constant 0 : index
    %22 = vector.load %arg2[%c0_12, %c0_13] : memref<16x8xf32, #tpu.memory_space<vmem>>, vector<16x8xf32>
    %23 = tpu.iota {dimensions = array<i32: 0>} : vector<16x16xi32>
    %24 = arith.sitofp %23 : vector<16x16xi32> to vector<16x16xf32>
    %cst_14 = arith.constant 5.000000e-01 : f32
    %25 = vector.broadcast %cst_14 : f32 to vector<16x16xf32>
    %26 = arith.addf %24, %25 : vector<16x16xf32>
    %cst_15 = arith.constant 1.250000e-01 : f32
    %27 = vector.broadcast %cst_15 : f32 to vector<16x16xf32>
    %28 = arith.mulf %26, %27 : vector<16x16xf32>
    %29 = math.floor %28 : vector<16x16xf32>
    %30 = tpu.iota {dimensions = array<i32: 1>} : vector<16x16xi32>
    %31 = arith.sitofp %30 : vector<16x16xi32> to vector<16x16xf32>
    %cst_16 = arith.constant 5.000000e-01 : f32
    %32 = vector.broadcast %cst_16 : f32 to vector<16x16xf32>
    %33 = arith.addf %31, %32 : vector<16x16xf32>
    %cst_17 = arith.constant 1.250000e-01 : f32
    %34 = vector.broadcast %cst_17 : f32 to vector<16x16xf32>
    %35 = arith.mulf %33, %34 : vector<16x16xf32>
    %36 = math.floor %35 : vector<16x16xf32>
    %37 = arith.cmpf oeq, %29, %36 : vector<16x16xf32>
    %38 = tpu.iota {dimensions = array<i32: 1>} : vector<8x16xi32>
    %39 = arith.sitofp %38 : vector<8x16xi32> to vector<8x16xf32>
    %cst_18 = arith.constant 5.000000e-01 : f32
    %40 = vector.broadcast %cst_18 : f32 to vector<8x16xf32>
    %41 = arith.addf %39, %40 : vector<8x16xf32>
    %cst_19 = arith.constant 1.250000e-01 : f32
    %42 = vector.broadcast %cst_19 : f32 to vector<8x16xf32>
    %43 = arith.mulf %41, %42 : vector<8x16xf32>
    %44 = math.floor %43 : vector<8x16xf32>
    %cst_20 = arith.constant 8.000000e+00 : f32
    %45 = vector.broadcast %cst_20 : f32 to vector<8x16xf32>
    %46 = arith.mulf %45, %44 : vector<8x16xf32>
    %47 = arith.subf %39, %46 : vector<8x16xf32>
    %48 = tpu.iota {dimensions = array<i32: 0>} : vector<8x16xi32>
    %49 = arith.sitofp %48 : vector<8x16xi32> to vector<8x16xf32>
    %50 = arith.cmpf oeq, %47, %49 : vector<8x16xf32>
    %cst_21 = arith.constant 1.000000e+00 : f32
    %cst_22 = arith.constant 0.000000e+00 : f32
    %51 = vector.broadcast %cst_21 : f32 to vector<8x16xf32>
    %52 = vector.broadcast %cst_22 : f32 to vector<8x16xf32>
    %53 = arith.select %50, %51, %52 : vector<8x16xi1>, vector<8x16xf32>
    %cst_23 = arith.constant dense<0.000000e+00> : vector<16x16xf32>
    %54 = tpu.matmul %22, %53, %cst_23 {dimension_numbers = #tpu.dot_dimension_numbers<[1], [0], [0], [1], [0, 0, 1, 1], [], []>} : vector<16x8xf32>, vector<8x16xf32>, vector<16x16xf32> -> vector<16x16xf32>
    %cst_24 = arith.constant 5.000000e-01 : f32
    %55 = vector.broadcast %cst_24 : f32 to vector<16x16xf32>
    %56 = arith.cmpf ogt, %54, %55 : vector<16x16xf32>
    %57 = arith.andi %37, %56 : vector<16x16xi1>
    %cst_25 = arith.constant 0.000000e+00 : f32
    %cst_26 = arith.constant -1.000000e+09 : f32
    %58 = vector.broadcast %cst_25 : f32 to vector<16x16xf32>
    %59 = vector.broadcast %cst_26 : f32 to vector<16x16xf32>
    %60 = arith.select %57, %58, %59 : vector<16x16xi1>, vector<16x16xf32>
    %61 = tpu.concatenate %60, %60, %60, %60 in 0 : vector<16x16xf32>, vector<16x16xf32>, vector<16x16xf32>, vector<16x16xf32> -> vector<64x16xf32>
    %c0_27 = arith.constant 0 : index
    %c0_28 = arith.constant 0 : index
    %62 = vector.load %arg3[%c0_27, %c0_28] : memref<16x12xf32, #tpu.memory_space<vmem>>, vector<16x12xf32>
    %63 = tpu.iota {dimensions = array<i32: 0>} : vector<16x24xi32>
    %64 = arith.sitofp %63 : vector<16x24xi32> to vector<16x24xf32>
    %cst_29 = arith.constant 5.000000e-01 : f32
    %65 = vector.broadcast %cst_29 : f32 to vector<16x24xf32>
    %66 = arith.addf %64, %65 : vector<16x24xf32>
    %cst_30 = arith.constant 1.250000e-01 : f32
    %67 = vector.broadcast %cst_30 : f32 to vector<16x24xf32>
    %68 = arith.mulf %66, %67 : vector<16x24xf32>
    %69 = math.floor %68 : vector<16x24xf32>
    %70 = tpu.iota {dimensions = array<i32: 1>} : vector<16x24xi32>
    %71 = arith.sitofp %70 : vector<16x24xi32> to vector<16x24xf32>
    %cst_31 = arith.constant 5.000000e-01 : f32
    %72 = vector.broadcast %cst_31 : f32 to vector<16x24xf32>
    %73 = arith.addf %71, %72 : vector<16x24xf32>
    %cst_32 = arith.constant 0.0833333358 : f32
    %74 = vector.broadcast %cst_32 : f32 to vector<16x24xf32>
    %75 = arith.mulf %73, %74 : vector<16x24xf32>
    %76 = math.floor %75 : vector<16x24xf32>
    %77 = arith.cmpf oeq, %69, %76 : vector<16x24xf32>
    %78 = tpu.iota {dimensions = array<i32: 1>} : vector<12x24xi32>
    %79 = arith.sitofp %78 : vector<12x24xi32> to vector<12x24xf32>
    %cst_33 = arith.constant 5.000000e-01 : f32
    %80 = vector.broadcast %cst_33 : f32 to vector<12x24xf32>
    %81 = arith.addf %79, %80 : vector<12x24xf32>
    %cst_34 = arith.constant 0.0833333358 : f32
    %82 = vector.broadcast %cst_34 : f32 to vector<12x24xf32>
    %83 = arith.mulf %81, %82 : vector<12x24xf32>
    %84 = math.floor %83 : vector<12x24xf32>
    %cst_35 = arith.constant 1.200000e+01 : f32
    %85 = vector.broadcast %cst_35 : f32 to vector<12x24xf32>
    %86 = arith.mulf %85, %84 : vector<12x24xf32>
    %87 = arith.subf %79, %86 : vector<12x24xf32>
    %88 = tpu.iota {dimensions = array<i32: 0>} : vector<12x24xi32>
    %89 = arith.sitofp %88 : vector<12x24xi32> to vector<12x24xf32>
    %90 = arith.cmpf oeq, %87, %89 : vector<12x24xf32>
    %cst_36 = arith.constant 1.000000e+00 : f32
    %cst_37 = arith.constant 0.000000e+00 : f32
    %91 = vector.broadcast %cst_36 : f32 to vector<12x24xf32>
    %92 = vector.broadcast %cst_37 : f32 to vector<12x24xf32>
    %93 = arith.select %90, %91, %92 : vector<12x24xi1>, vector<12x24xf32>
    %cst_38 = arith.constant dense<0.000000e+00> : vector<16x24xf32>
    %94 = tpu.matmul %62, %93, %cst_38 {dimension_numbers = #tpu.dot_dimension_numbers<[1], [0], [0], [1], [0, 0, 1, 1], [], []>} : vector<16x12xf32>, vector<12x24xf32>, vector<16x24xf32> -> vector<16x24xf32>
    %cst_39 = arith.constant 5.000000e-01 : f32
    %95 = vector.broadcast %cst_39 : f32 to vector<16x24xf32>
    %96 = arith.cmpf ogt, %94, %95 : vector<16x24xf32>
    %97 = arith.andi %77, %96 : vector<16x24xi1>
    %cst_40 = arith.constant 0.000000e+00 : f32
    %cst_41 = arith.constant -1.000000e+09 : f32
    %98 = vector.broadcast %cst_40 : f32 to vector<16x24xf32>
    %99 = vector.broadcast %cst_41 : f32 to vector<16x24xf32>
    %100 = arith.select %97, %98, %99 : vector<16x24xi1>, vector<16x24xf32>
    %101 = tpu.concatenate %100, %100, %100, %100 in 0 : vector<16x24xf32>, vector<16x24xf32>, vector<16x24xf32>, vector<16x24xf32> -> vector<64x24xf32>
    %102 = vector.extract_strided_slice %3 {offsets = [0, 0], sizes = [1, 32], strides = [1, 1]} : vector<13x96xf32> to vector<1x32xf32>
    %103 = vector.shape_cast %102 : vector<1x32xf32> to vector<32xf32>
    %104 = vector.extract_strided_slice %3 {offsets = [1, 0], sizes = [1, 32], strides = [1, 1]} : vector<13x96xf32> to vector<1x32xf32>
    %105 = vector.shape_cast %104 : vector<1x32xf32> to vector<32xf32>
    %cst_42 = arith.constant dense<0.000000e+00> : vector<16xf32>
    %106 = vector.multi_reduction <add>, %0, %cst_42 [1] : vector<16x32xf32> to vector<16xf32>
    %107 = vector.shape_cast %106 : vector<16xf32> to vector<16x1xf32>
    %cst_43 = arith.constant 3.200000e+01 : f32
    %108 = vector.broadcast %cst_43 : f32 to vector<16x1xf32>
    %109 = arith.divf %107, %108 : vector<16x1xf32>
    %110 = vector.broadcast %109 : vector<16x1xf32> to vector<16x32xf32>
    %111 = arith.subf %0, %110 : vector<16x32xf32>
    %112 = arith.mulf %111, %111 : vector<16x32xf32>
    %cst_44 = arith.constant dense<0.000000e+00> : vector<16xf32>
    %113 = vector.multi_reduction <add>, %112, %cst_44 [1] : vector<16x32xf32> to vector<16xf32>
    %114 = vector.shape_cast %113 : vector<16xf32> to vector<16x1xf32>
    %cst_45 = arith.constant 3.200000e+01 : f32
    %115 = vector.broadcast %cst_45 : f32 to vector<16x1xf32>
    %116 = arith.divf %114, %115 : vector<16x1xf32>
    %117 = vector.broadcast %109 : vector<16x1xf32> to vector<16x32xf32>
    %118 = arith.subf %0, %117 : vector<16x32xf32>
    %cst_46 = arith.constant 9.99999974E-6 : f32
    %119 = vector.broadcast %cst_46 : f32 to vector<16x1xf32>
    %120 = arith.addf %116, %119 : vector<16x1xf32>
    %121 = math.rsqrt %120 : vector<16x1xf32>
    %122 = vector.broadcast %121 : vector<16x1xf32> to vector<16x32xf32>
    %123 = arith.mulf %118, %122 : vector<16x32xf32>
    %124 = vector.shape_cast %103 : vector<32xf32> to vector<1x32xf32>
    %125 = vector.broadcast %124 : vector<1x32xf32> to vector<16x32xf32>
    %126 = arith.mulf %123, %125 : vector<16x32xf32>
    %127 = vector.shape_cast %105 : vector<32xf32> to vector<1x32xf32>
    %128 = vector.broadcast %127 : vector<1x32xf32> to vector<16x32xf32>
    %129 = arith.addf %126, %128 : vector<16x32xf32>
    %130 = vector.extract_strided_slice %2 {offsets = [0, 0], sizes = [32, 96], strides = [1, 1]} : vector<32x320xf32> to vector<32x96xf32>
    %cst_47 = arith.constant dense<0.000000e+00> : vector<16x96xf32>
    %131 = tpu.matmul %129, %130, %cst_47 {dimension_numbers = #tpu.dot_dimension_numbers<[1], [0], [0], [1], [0, 0, 1, 1], [], []>} : vector<16x32xf32>, vector<32x96xf32>, vector<16x96xf32> -> vector<16x96xf32>
    %132 = vector.extract_strided_slice %3 {offsets = [6, 0], sizes = [1, 96], strides = [1, 1]} : vector<13x96xf32> to vector<1x96xf32>
    %133 = vector.shape_cast %132 : vector<1x96xf32> to vector<96xf32>
    %134 = vector.shape_cast %133 : vector<96xf32> to vector<1x96xf32>
    %135 = vector.broadcast %134 : vector<1x96xf32> to vector<16x96xf32>
    %136 = arith.addf %131, %135 : vector<16x96xf32>
    %137 = vector.extract_strided_slice %136 {offsets = [0, 0], sizes = [16, 32], strides = [1, 1]} : vector<16x96xf32> to vector<16x32xf32>
    %138 = vector.extract_strided_slice %136 {offsets = [0, 32], sizes = [16, 32], strides = [1, 1]} : vector<16x96xf32> to vector<16x32xf32>
    %139 = vector.extract_strided_slice %136 {offsets = [0, 64], sizes = [16, 32], strides = [1, 1]} : vector<16x96xf32> to vector<16x32xf32>
    %140 = vector.extract_strided_slice %2 {offsets = [0, 96], sizes = [32, 32], strides = [1, 1]} : vector<32x320xf32> to vector<32x32xf32>
    %141 = vector.extract_strided_slice %3 {offsets = [7, 0], sizes = [1, 32], strides = [1, 1]} : vector<13x96xf32> to vector<1x32xf32>
    %142 = vector.shape_cast %141 : vector<1x32xf32> to vector<32xf32>
    %143 = tpu.concatenate %137, %137, %137, %137 in 0 : vector<16x32xf32>, vector<16x32xf32>, vector<16x32xf32>, vector<16x32xf32> -> vector<64x32xf32>
    %144 = arith.mulf %143, %21 : vector<64x32xf32>
    %145 = tpu.transpose %138, [1, 0] : vector<16x32xf32> -> vector<32x16xf32>
    %cst_48 = arith.constant dense<0.000000e+00> : vector<64x16xf32>
    %146 = tpu.matmul %144, %145, %cst_48 {dimension_numbers = #tpu.dot_dimension_numbers<[1], [0], [0], [1], [0, 0, 1, 1], [], []>} : vector<64x32xf32>, vector<32x16xf32>, vector<64x16xf32> -> vector<64x16xf32>
    %147 = arith.addf %146, %61 : vector<64x16xf32>
    %cst_49 = arith.constant dense<0xFF800000> : vector<64xf32>
    %148 = vector.multi_reduction <maximumf>, %147, %cst_49 [1] : vector<64x16xf32> to vector<64xf32>
    %149 = vector.shape_cast %148 : vector<64xf32> to vector<64x1xf32>
    %150 = vector.broadcast %149 : vector<64x1xf32> to vector<64x16xf32>
    %151 = arith.subf %147, %150 : vector<64x16xf32>
    %152 = math.exp %151 : vector<64x16xf32>
    %cst_50 = arith.constant dense<0.000000e+00> : vector<64xf32>
    %153 = vector.multi_reduction <add>, %152, %cst_50 [1] : vector<64x16xf32> to vector<64xf32>
    %154 = vector.shape_cast %153 : vector<64xf32> to vector<64x1xf32>
    %155 = tpu.reciprocal %154 {approx = true} : vector<64x1xf32> -> vector<64x1xf32>
    %156 = arith.mulf %154, %155 : vector<64x1xf32>
    %cst_51 = arith.constant 2.000000e+00 : f32
    %157 = vector.broadcast %cst_51 : f32 to vector<64x1xf32>
    %158 = arith.subf %157, %156 : vector<64x1xf32>
    %159 = arith.mulf %155, %158 : vector<64x1xf32>
    %160 = vector.broadcast %159 : vector<64x1xf32> to vector<64x16xf32>
    %161 = arith.mulf %152, %160 : vector<64x16xf32>
    %cst_52 = arith.constant dense<0.000000e+00> : vector<64x32xf32>
    %162 = tpu.matmul %161, %139, %cst_52 {dimension_numbers = #tpu.dot_dimension_numbers<[1], [0], [0], [1], [0, 0, 1, 1], [], []>} : vector<64x16xf32>, vector<16x32xf32>, vector<64x32xf32> -> vector<64x32xf32>
    %163 = arith.mulf %162, %21 : vector<64x32xf32>
    %164 = vector.extract_strided_slice %163 {offsets = [0, 0], sizes = [16, 32], strides = [1, 1]} : vector<64x32xf32> to vector<16x32xf32>
    %165 = vector.extract_strided_slice %163 {offsets = [16, 0], sizes = [16, 32], strides = [1, 1]} : vector<64x32xf32> to vector<16x32xf32>
    %166 = arith.addf %164, %165 : vector<16x32xf32>
    %167 = vector.extract_strided_slice %163 {offsets = [32, 0], sizes = [16, 32], strides = [1, 1]} : vector<64x32xf32> to vector<16x32xf32>
    %168 = arith.addf %166, %167 : vector<16x32xf32>
    %169 = vector.extract_strided_slice %163 {offsets = [48, 0], sizes = [16, 32], strides = [1, 1]} : vector<64x32xf32> to vector<16x32xf32>
    %170 = arith.addf %168, %169 : vector<16x32xf32>
    %cst_53 = arith.constant dense<0.000000e+00> : vector<16x32xf32>
    %171 = tpu.matmul %170, %140, %cst_53 {dimension_numbers = #tpu.dot_dimension_numbers<[1], [0], [0], [1], [0, 0, 1, 1], [], []>} : vector<16x32xf32>, vector<32x32xf32>, vector<16x32xf32> -> vector<16x32xf32>
    %172 = vector.shape_cast %142 : vector<32xf32> to vector<1x32xf32>
    %173 = vector.broadcast %172 : vector<1x32xf32> to vector<16x32xf32>
    %174 = arith.addf %171, %173 : vector<16x32xf32>
    %175 = arith.addf %0, %174 : vector<16x32xf32>
    %176 = vector.extract_strided_slice %3 {offsets = [2, 0], sizes = [1, 32], strides = [1, 1]} : vector<13x96xf32> to vector<1x32xf32>
    %177 = vector.shape_cast %176 : vector<1x32xf32> to vector<32xf32>
    %178 = vector.extract_strided_slice %3 {offsets = [3, 0], sizes = [1, 32], strides = [1, 1]} : vector<13x96xf32> to vector<1x32xf32>
    %179 = vector.shape_cast %178 : vector<1x32xf32> to vector<32xf32>
    %cst_54 = arith.constant dense<0.000000e+00> : vector<16xf32>
    %180 = vector.multi_reduction <add>, %175, %cst_54 [1] : vector<16x32xf32> to vector<16xf32>
    %181 = vector.shape_cast %180 : vector<16xf32> to vector<16x1xf32>
    %cst_55 = arith.constant 3.200000e+01 : f32
    %182 = vector.broadcast %cst_55 : f32 to vector<16x1xf32>
    %183 = arith.divf %181, %182 : vector<16x1xf32>
    %184 = vector.broadcast %183 : vector<16x1xf32> to vector<16x32xf32>
    %185 = arith.subf %175, %184 : vector<16x32xf32>
    %186 = arith.mulf %185, %185 : vector<16x32xf32>
    %cst_56 = arith.constant dense<0.000000e+00> : vector<16xf32>
    %187 = vector.multi_reduction <add>, %186, %cst_56 [1] : vector<16x32xf32> to vector<16xf32>
    %188 = vector.shape_cast %187 : vector<16xf32> to vector<16x1xf32>
    %cst_57 = arith.constant 3.200000e+01 : f32
    %189 = vector.broadcast %cst_57 : f32 to vector<16x1xf32>
    %190 = arith.divf %188, %189 : vector<16x1xf32>
    %191 = vector.broadcast %183 : vector<16x1xf32> to vector<16x32xf32>
    %192 = arith.subf %175, %191 : vector<16x32xf32>
    %cst_58 = arith.constant 9.99999974E-6 : f32
    %193 = vector.broadcast %cst_58 : f32 to vector<16x1xf32>
    %194 = arith.addf %190, %193 : vector<16x1xf32>
    %195 = math.rsqrt %194 : vector<16x1xf32>
    %196 = vector.broadcast %195 : vector<16x1xf32> to vector<16x32xf32>
    %197 = arith.mulf %192, %196 : vector<16x32xf32>
    %198 = vector.shape_cast %177 : vector<32xf32> to vector<1x32xf32>
    %199 = vector.broadcast %198 : vector<1x32xf32> to vector<16x32xf32>
    %200 = arith.mulf %197, %199 : vector<16x32xf32>
    %201 = vector.shape_cast %179 : vector<32xf32> to vector<1x32xf32>
    %202 = vector.broadcast %201 : vector<1x32xf32> to vector<16x32xf32>
    %203 = arith.addf %200, %202 : vector<16x32xf32>
    %204 = vector.extract_strided_slice %2 {offsets = [0, 128], sizes = [32, 32], strides = [1, 1]} : vector<32x320xf32> to vector<32x32xf32>
    %cst_59 = arith.constant dense<0.000000e+00> : vector<16x32xf32>
    %205 = tpu.matmul %203, %204, %cst_59 {dimension_numbers = #tpu.dot_dimension_numbers<[1], [0], [0], [1], [0, 0, 1, 1], [], []>} : vector<16x32xf32>, vector<32x32xf32>, vector<16x32xf32> -> vector<16x32xf32>
    %206 = vector.extract_strided_slice %3 {offsets = [8, 0], sizes = [1, 32], strides = [1, 1]} : vector<13x96xf32> to vector<1x32xf32>
    %207 = vector.shape_cast %206 : vector<1x32xf32> to vector<32xf32>
    %208 = vector.shape_cast %207 : vector<32xf32> to vector<1x32xf32>
    %209 = vector.broadcast %208 : vector<1x32xf32> to vector<16x32xf32>
    %210 = arith.addf %205, %209 : vector<16x32xf32>
    %211 = vector.extract_strided_slice %2 {offsets = [0, 160], sizes = [32, 64], strides = [1, 1]} : vector<32x320xf32> to vector<32x64xf32>
    %cst_60 = arith.constant dense<0.000000e+00> : vector<24x64xf32>
    %212 = tpu.matmul %1, %211, %cst_60 {dimension_numbers = #tpu.dot_dimension_numbers<[1], [0], [0], [1], [0, 0, 1, 1], [], []>} : vector<24x32xf32>, vector<32x64xf32>, vector<24x64xf32> -> vector<24x64xf32>
    %213 = vector.extract_strided_slice %3 {offsets = [9, 0], sizes = [1, 64], strides = [1, 1]} : vector<13x96xf32> to vector<1x64xf32>
    %214 = vector.shape_cast %213 : vector<1x64xf32> to vector<64xf32>
    %215 = vector.shape_cast %214 : vector<64xf32> to vector<1x64xf32>
    %216 = vector.broadcast %215 : vector<1x64xf32> to vector<24x64xf32>
    %217 = arith.addf %212, %216 : vector<24x64xf32>
    %218 = vector.extract_strided_slice %217 {offsets = [0, 0], sizes = [24, 32], strides = [1, 1]} : vector<24x64xf32> to vector<24x32xf32>
    %219 = vector.extract_strided_slice %217 {offsets = [0, 32], sizes = [24, 32], strides = [1, 1]} : vector<24x64xf32> to vector<24x32xf32>
    %220 = vector.extract_strided_slice %2 {offsets = [0, 224], sizes = [32, 32], strides = [1, 1]} : vector<32x320xf32> to vector<32x32xf32>
    %221 = vector.extract_strided_slice %3 {offsets = [10, 0], sizes = [1, 32], strides = [1, 1]} : vector<13x96xf32> to vector<1x32xf32>
    %222 = vector.shape_cast %221 : vector<1x32xf32> to vector<32xf32>
    %223 = tpu.concatenate %210, %210, %210, %210 in 0 : vector<16x32xf32>, vector<16x32xf32>, vector<16x32xf32>, vector<16x32xf32> -> vector<64x32xf32>
    %224 = arith.mulf %223, %21 : vector<64x32xf32>
    %225 = tpu.transpose %218, [1, 0] : vector<24x32xf32> -> vector<32x24xf32>
    %cst_61 = arith.constant dense<0.000000e+00> : vector<64x24xf32>
    %226 = tpu.matmul %224, %225, %cst_61 {dimension_numbers = #tpu.dot_dimension_numbers<[1], [0], [0], [1], [0, 0, 1, 1], [], []>} : vector<64x32xf32>, vector<32x24xf32>, vector<64x24xf32> -> vector<64x24xf32>
    %227 = arith.addf %226, %101 : vector<64x24xf32>
    %cst_62 = arith.constant dense<0xFF800000> : vector<64xf32>
    %228 = vector.multi_reduction <maximumf>, %227, %cst_62 [1] : vector<64x24xf32> to vector<64xf32>
    %229 = vector.shape_cast %228 : vector<64xf32> to vector<64x1xf32>
    %230 = vector.broadcast %229 : vector<64x1xf32> to vector<64x24xf32>
    %231 = arith.subf %227, %230 : vector<64x24xf32>
    %232 = math.exp %231 : vector<64x24xf32>
    %cst_63 = arith.constant dense<0.000000e+00> : vector<64xf32>
    %233 = vector.multi_reduction <add>, %232, %cst_63 [1] : vector<64x24xf32> to vector<64xf32>
    %234 = vector.shape_cast %233 : vector<64xf32> to vector<64x1xf32>
    %235 = tpu.reciprocal %234 {approx = true} : vector<64x1xf32> -> vector<64x1xf32>
    %236 = arith.mulf %234, %235 : vector<64x1xf32>
    %cst_64 = arith.constant 2.000000e+00 : f32
    %237 = vector.broadcast %cst_64 : f32 to vector<64x1xf32>
    %238 = arith.subf %237, %236 : vector<64x1xf32>
    %239 = arith.mulf %235, %238 : vector<64x1xf32>
    %240 = vector.broadcast %239 : vector<64x1xf32> to vector<64x24xf32>
    %241 = arith.mulf %232, %240 : vector<64x24xf32>
    %cst_65 = arith.constant dense<0.000000e+00> : vector<64x32xf32>
    %242 = tpu.matmul %241, %219, %cst_65 {dimension_numbers = #tpu.dot_dimension_numbers<[1], [0], [0], [1], [0, 0, 1, 1], [], []>} : vector<64x24xf32>, vector<24x32xf32>, vector<64x32xf32> -> vector<64x32xf32>
    %243 = arith.mulf %242, %21 : vector<64x32xf32>
    %244 = vector.extract_strided_slice %243 {offsets = [0, 0], sizes = [16, 32], strides = [1, 1]} : vector<64x32xf32> to vector<16x32xf32>
    %245 = vector.extract_strided_slice %243 {offsets = [16, 0], sizes = [16, 32], strides = [1, 1]} : vector<64x32xf32> to vector<16x32xf32>
    %246 = arith.addf %244, %245 : vector<16x32xf32>
    %247 = vector.extract_strided_slice %243 {offsets = [32, 0], sizes = [16, 32], strides = [1, 1]} : vector<64x32xf32> to vector<16x32xf32>
    %248 = arith.addf %246, %247 : vector<16x32xf32>
    %249 = vector.extract_strided_slice %243 {offsets = [48, 0], sizes = [16, 32], strides = [1, 1]} : vector<64x32xf32> to vector<16x32xf32>
    %250 = arith.addf %248, %249 : vector<16x32xf32>
    %cst_66 = arith.constant dense<0.000000e+00> : vector<16x32xf32>
    %251 = tpu.matmul %250, %220, %cst_66 {dimension_numbers = #tpu.dot_dimension_numbers<[1], [0], [0], [1], [0, 0, 1, 1], [], []>} : vector<16x32xf32>, vector<32x32xf32>, vector<16x32xf32> -> vector<16x32xf32>
    %252 = vector.shape_cast %222 : vector<32xf32> to vector<1x32xf32>
    %253 = vector.broadcast %252 : vector<1x32xf32> to vector<16x32xf32>
    %254 = arith.addf %251, %253 : vector<16x32xf32>
    %255 = arith.addf %175, %254 : vector<16x32xf32>
    %256 = vector.extract_strided_slice %3 {offsets = [4, 0], sizes = [1, 32], strides = [1, 1]} : vector<13x96xf32> to vector<1x32xf32>
    %257 = vector.shape_cast %256 : vector<1x32xf32> to vector<32xf32>
    %258 = vector.extract_strided_slice %3 {offsets = [5, 0], sizes = [1, 32], strides = [1, 1]} : vector<13x96xf32> to vector<1x32xf32>
    %259 = vector.shape_cast %258 : vector<1x32xf32> to vector<32xf32>
    %cst_67 = arith.constant dense<0.000000e+00> : vector<16xf32>
    %260 = vector.multi_reduction <add>, %255, %cst_67 [1] : vector<16x32xf32> to vector<16xf32>
    %261 = vector.shape_cast %260 : vector<16xf32> to vector<16x1xf32>
    %cst_68 = arith.constant 3.200000e+01 : f32
    %262 = vector.broadcast %cst_68 : f32 to vector<16x1xf32>
    %263 = arith.divf %261, %262 : vector<16x1xf32>
    %264 = vector.broadcast %263 : vector<16x1xf32> to vector<16x32xf32>
    %265 = arith.subf %255, %264 : vector<16x32xf32>
    %266 = arith.mulf %265, %265 : vector<16x32xf32>
    %cst_69 = arith.constant dense<0.000000e+00> : vector<16xf32>
    %267 = vector.multi_reduction <add>, %266, %cst_69 [1] : vector<16x32xf32> to vector<16xf32>
    %268 = vector.shape_cast %267 : vector<16xf32> to vector<16x1xf32>
    %cst_70 = arith.constant 3.200000e+01 : f32
    %269 = vector.broadcast %cst_70 : f32 to vector<16x1xf32>
    %270 = arith.divf %268, %269 : vector<16x1xf32>
    %271 = vector.broadcast %263 : vector<16x1xf32> to vector<16x32xf32>
    %272 = arith.subf %255, %271 : vector<16x32xf32>
    %cst_71 = arith.constant 9.99999974E-6 : f32
    %273 = vector.broadcast %cst_71 : f32 to vector<16x1xf32>
    %274 = arith.addf %270, %273 : vector<16x1xf32>
    %275 = math.rsqrt %274 : vector<16x1xf32>
    %276 = vector.broadcast %275 : vector<16x1xf32> to vector<16x32xf32>
    %277 = arith.mulf %272, %276 : vector<16x32xf32>
    %278 = vector.shape_cast %257 : vector<32xf32> to vector<1x32xf32>
    %279 = vector.broadcast %278 : vector<1x32xf32> to vector<16x32xf32>
    %280 = arith.mulf %277, %279 : vector<16x32xf32>
    %281 = vector.shape_cast %259 : vector<32xf32> to vector<1x32xf32>
    %282 = vector.broadcast %281 : vector<1x32xf32> to vector<16x32xf32>
    %283 = arith.addf %280, %282 : vector<16x32xf32>
    %284 = vector.extract_strided_slice %2 {offsets = [0, 256], sizes = [32, 64], strides = [1, 1]} : vector<32x320xf32> to vector<32x64xf32>
    %cst_72 = arith.constant dense<0.000000e+00> : vector<16x64xf32>
    %285 = tpu.matmul %283, %284, %cst_72 {dimension_numbers = #tpu.dot_dimension_numbers<[1], [0], [0], [1], [0, 0, 1, 1], [], []>} : vector<16x32xf32>, vector<32x64xf32>, vector<16x64xf32> -> vector<16x64xf32>
    %286 = vector.extract_strided_slice %3 {offsets = [11, 0], sizes = [1, 64], strides = [1, 1]} : vector<13x96xf32> to vector<1x64xf32>
    %287 = vector.shape_cast %286 : vector<1x64xf32> to vector<64xf32>
    %288 = vector.shape_cast %287 : vector<64xf32> to vector<1x64xf32>
    %289 = vector.broadcast %288 : vector<1x64xf32> to vector<16x64xf32>
    %290 = arith.addf %285, %289 : vector<16x64xf32>
    %cst_73 = arith.constant 0.000000e+00 : f32
    %291 = vector.broadcast %cst_73 : f32 to vector<16x64xf32>
    %292 = arith.maximumf %290, %291 : vector<16x64xf32>
    %c0_74 = arith.constant 0 : index
    %c0_75 = arith.constant 0 : index
    %293 = vector.load %arg5[%c0_74, %c0_75] : memref<64x32xf32, #tpu.memory_space<vmem>>, vector<64x32xf32>
    %cst_76 = arith.constant dense<0.000000e+00> : vector<16x32xf32>
    %294 = tpu.matmul %292, %293, %cst_76 {dimension_numbers = #tpu.dot_dimension_numbers<[1], [0], [0], [1], [0, 0, 1, 1], [], []>} : vector<16x64xf32>, vector<64x32xf32>, vector<16x32xf32> -> vector<16x32xf32>
    %295 = vector.extract_strided_slice %3 {offsets = [12, 0], sizes = [1, 32], strides = [1, 1]} : vector<13x96xf32> to vector<1x32xf32>
    %296 = vector.shape_cast %295 : vector<1x32xf32> to vector<32xf32>
    %297 = vector.shape_cast %296 : vector<32xf32> to vector<1x32xf32>
    %298 = vector.broadcast %297 : vector<1x32xf32> to vector<16x32xf32>
    %299 = arith.addf %294, %298 : vector<16x32xf32>
    %300 = arith.addf %255, %299 : vector<16x32xf32>
    %c0_77 = arith.constant 0 : index
    %c0_78 = arith.constant 0 : index
    %301 = vector.load %arg7[%c0_77, %c0_78] : memref<16x32xf32, #tpu.memory_space<vmem>>, vector<16x32xf32>
    tpu.vector_store %arg7[%c0_77, %c0_78], %300 {strides = array<i32>} : memref<16x32xf32, #tpu.memory_space<vmem>>, vector<16x32xf32>,
    return
  }
}

</mosaic_0001>

<llo_original>
// kernel: decoder_layer.1
$region0: #{decoder_layer.1}
  #allocation0 [shape = 'u32[]', space=smem, size = 0x4, offset = 0x4, fixed_abs, tag = 'smem constant byte address 0x4 - core index']
  #allocation1 [shape = 'u32[72,128]{1,0:T(1,128)}', space=vmem, size = 0x9000, scoped, tag = 'internal scratch']
  %s0 = inlined_call_operand.vmem [shape: f32[16,32], index: 0, kind: input, shape index: {}]
  %s1 = inlined_call_operand.vmem [shape: f32[24,32], index: 1, kind: input, shape index: {}]
  %s2 = inlined_call_operand.vmem [shape: f32[16,8], index: 2, kind: input, shape index: {}]
  %s3 = inlined_call_operand.vmem [shape: f32[16,12], index: 3, kind: input, shape index: {}]
  %s4 = inlined_call_operand.vmem [shape: f32[32,320], index: 4, kind: input, shape index: {}]
  %s5 = inlined_call_operand.vmem [shape: f32[64,32], index: 5, kind: input, shape index: {}]
  %s6 = inlined_call_operand.vmem [shape: f32[13,96], index: 6, kind: input, shape index: {}]
  %s7 = inlined_call_operand.hbm [shape: f32[16,32], index: 7, kind: output, shape index: {}]
  %s8 = sld [smem:[#allocation0]]
  $region38: #{decoder_layer.1} parent=0
    _
  %s10 = ssub.s32 1, %s8
  %s11 = scalar_select 0, %s10, %s8
  $region1: #{decoder_layer.1} parent=0
    #allocation2 [shape = 'u8[8192]{0}', space=vmem, size = 0x2000, scoped, tag = 'output window, operand 0, single buffered']
    #allocation3 [shape = 's32[1]{0}', space=sflag, size = 0x4, scoped, tag = 'scoped memory for decoder_layer.1']
    %12 = vsyncpa [#allocation3], 0
    // Predicated region
    $region2: #{decoder_layer.1} parent=1 // pred_check
      _
    $region3: #{decoder_layer.1} parent=1 // pred_check_branch
      %14 = sbr.rel (0) target = $region5
    $region4: #{decoder_layer.1} parent=1 // pred_region
      _
    $region5: #{decoder_layer.1} parent=1 // pred_fallthru
      _
    // Predicated region
    $region6: #{decoder_layer.1} parent=1 // pred_check
      _
    $region7: #{decoder_layer.1} parent=1 // pred_check_branch
      %16 = sbr.rel (0) target = $region9
    $region8: #{decoder_layer.1} parent=1 // pred_region
      _
    $region9: #{decoder_layer.1} parent=1 // pred_fallthru
      _
    // Predicated region
    $region10: #{decoder_layer.1} parent=1 // pred_check
      _
    $region11: #{decoder_layer.1} parent=1 // pred_check_branch
      %18 = sbr.rel (0) target = $region13
    $region12: #{decoder_layer.1} parent=1 // pred_region
      _
    $region13: #{decoder_layer.1} parent=1 // pred_fallthru
      _
    // Predicated region
    $region14: #{decoder_layer.1} parent=1 // pred_check
      _
    $region15: #{decoder_layer.1} parent=1 // pred_check_branch
      %20 = sbr.rel (0) target = $region17
    $region16: #{decoder_layer.1} parent=1 // pred_region
      _
    $region17: #{decoder_layer.1} parent=1 // pred_fallthru
      _
    // Predicated region
    $region18: #{decoder_layer.1} parent=1 // pred_check
      _
    $region19: #{decoder_layer.1} parent=1 // pred_check_branch
      %22 = sbr.rel (0) target = $region21
    $region20: #{decoder_layer.1} parent=1 // pred_region
      _
    $region21: #{decoder_layer.1} parent=1 // pred_fallthru
      _
    // Predicated region
    $region22: #{decoder_layer.1} parent=1 // pred_check
      _
    $region23: #{decoder_layer.1} parent=1 // pred_check_branch
      %24 = sbr.rel (0) target = $region25
    $region24: #{decoder_layer.1} parent=1 // pred_region
      _
    $region25: #{decoder_layer.1} parent=1 // pred_fallthru
      _
    // Predicated region
    $region26: #{decoder_layer.1} parent=1 // pred_check
      _
    $region27: #{decoder_layer.1} parent=1 // pred_check_branch
      %26 = sbr.rel (0) target = $region29
    $region28: #{decoder_layer.1} parent=1 // pred_region
      _
    $region29: #{decoder_layer.1} parent=1 // pred_fallthru
      _
    %v27 = vld [vmem:[%s0] sm:$0xff]
    %v28 = vld [vmem:[%s0 + $0x8] sm:$0xff]
    %v29 = vld [vmem:[%s1] sm:$0xff]
    %v30 = vld [vmem:[%s1 + $0x8] sm:$0xff]
    %v31 = vld [vmem:[%s1 + $0x10] sm:$0xff]
    %v32 = vld [vmem:[%s4] sm:$0xff]
    %v33 = vld [vmem:[%s4 + $0x8] sm:$0xff]
    %v34 = vld [vmem:[%s4 + $0x10] sm:$0xff]
    %v35 = vld [vmem:[%s4 + $0x18] sm:$0xff]
    %v36 = vld [vmem:[%s4 + $0x20] sm:$0xff]
    %v37 = vld [vmem:[%s4 + $0x28] sm:$0xff]
    %v38 = vld [vmem:[%s4 + $0x30] sm:$0xff]
    %v39 = vld [vmem:[%s4 + $0x38] sm:$0xff]
    %v40 = vld [vmem:[%s4 + $0x40] sm:$0xff]
    %v41 = vld [vmem:[%s4 + $0x48] sm:$0xff]
    %v42 = vld [vmem:[%s4 + $0x50] sm:$0xff]
    %v43 = vld [vmem:[%s4 + $0x58] sm:$0xff]
    %v44 = vld [vmem:[%s6] sm:$0xff]
    %v45 = vld [vmem:[%s6 + $0x8] sm:$0x1f]
    %v46 = vlaneseq
    %v47 = vshrl.u32 %v46, 7
    %v48 = vadd.s32 %v47, 8
    %v49 = vadd.s32 %v47, 16
    %v50 = vadd.s32 %v47, 24
    %v51 = vadd.s32 %v47, 32
    %v52 = vadd.s32 %v47, 40
    %v53 = vadd.s32 %v47, 48
    %v54 = vadd.s32 %v47, 56
    %v55 = vcvt.s32.f32 %v47
    %v56 = vcvt.s32.f32 %v48
    %v57 = vcvt.s32.f32 %v49
    %v58 = vcvt.s32.f32 %v50
    %v59 = vcvt.s32.f32 %v51
    %v60 = vcvt.s32.f32 %v52
    %v61 = vcvt.s32.f32 %v53
    %v62 = vcvt.s32.f32 %v54
    %v63 = vadd.f32 %v55, 0.5
    %v64 = vadd.f32 %v56, 0.5
    %v65 = vadd.f32 %v57, 0.5
    %v66 = vadd.f32 %v58, 0.5
    %v67 = vadd.f32 %v59, 0.5
    %v68 = vadd.f32 %v60, 0.5
    %v69 = vadd.f32 %v61, 0.5
    %v70 = vadd.f32 %v62, 0.5
    %v71 = vmul.f32 %v63, 0.0625
    %v72 = vmul.f32 %v64, 0.0625
    %v73 = vmul.f32 %v65, 0.0625
    %v74 = vmul.f32 %v66, 0.0625
    %v75 = vmul.f32 %v67, 0.0625
    %v76 = vmul.f32 %v68, 0.0625
    %v77 = vmul.f32 %v69, 0.0625
    %v78 = vmul.f32 %v70, 0.0625
    %v79 = vfloor.f32 %v71
    %v80 = vfloor.f32 %v72
    %v81 = vfloor.f32 %v73
    %v82 = vfloor.f32 %v74
    %v83 = vfloor.f32 %v75
    %v84 = vfloor.f32 %v76
    %v85 = vfloor.f32 %v77
    %v86 = vfloor.f32 %v78
    %v87 = vlaneseq
    %v88 = vand.u32 %v87, 127
    %v89 = vcvt.s32.f32 %v88
    %v90 = vadd.f32 %v89, 0.5
    %v91 = vmul.f32 %v90, 0.125
    %v92 = vfloor.f32 %v91
    %vm93 = vcmp.eq.f32.partialorder %v79, %v92
    %vm94 = vcmp.eq.f32.partialorder %v80, %v92
    %vm95 = vcmp.eq.f32.partialorder %v81, %v92
    %vm96 = vcmp.eq.f32.partialorder %v82, %v92
    %vm97 = vcmp.eq.f32.partialorder %v83, %v92
    %vm98 = vcmp.eq.f32.partialorder %v84, %v92
    %vm99 = vcmp.eq.f32.partialorder %v85, %v92
    %vm100 = vcmp.eq.f32.partialorder %v86, %v92
    %v101 = vsel %vm93, 1.0, 0.0
    %v102 = vsel %vm94, 1.0, 0.0
    %v103 = vsel %vm95, 1.0, 0.0
    %v104 = vsel %vm96, 1.0, 0.0
    %v105 = vsel %vm97, 1.0, 0.0
    %v106 = vsel %vm98, 1.0, 0.0
    %v107 = vsel %vm99, 1.0, 0.0
    %v108 = vsel %vm100, 1.0, 0.0
    %v109 = vld [vmem:[%s2] sm:$0xff]
    %v110 = vld [vmem:[%s2 + $0x8] sm:$0xff]
    %v111 = vmul.f32 %v63, 0.125
    %v112 = vmul.f32 %v64, 0.125
    %v113 = vfloor.f32 %v111
    %v114 = vfloor.f32 %v112
    %vm115 = vcmp.eq.f32.partialorder %v113, %v92
    %vm116 = vcmp.eq.f32.partialorder %v114, %v92
    %v117 = vmul.f32 %v92, 8.0
    %v118 = vsub.f32 %v89, %v117
    %vm119 = vcmp.eq.f32.partialorder %v118, %v55
    %v120 = vsel %vm119, 1.0, 0.0
    %vm121 = vcmask 64512
    %v123 = vsel %vm121, %v109, 0
    %v126 = vsel %vm121, %v110, 0
    %128 = vmatpush.msra.mxu0 0.0
    %129 = vmatpush.msra.mxu0 0.0
    %130 = vmatpush.msra.mxu0 0.0
    %131 = vmatpush.msra.mxu0 0.0
    %132 = vmatpush.msra.mxu0 0.0
    %133 = vmatpush.msra.mxu0 0.0
    %134 = vmatpush.msra.mxu0 0.0
    %135 = vmatpush.msra.mxu0 0.0
    %136 = vmatpush.msra.mxu0 0.0
    %137 = vmatpush.msra.mxu0 0.0
    %138 = vmatpush.msra.mxu0 0.0
    %139 = vmatpush.msra.mxu0 0.0
    %140 = vmatpush.msra.mxu0 0.0
    %141 = vmatpush.msra.mxu0 0.0
    %142 = vmatpush.msra.mxu0 0.0
    %143 = vmatpush.msra.mxu0 %v120
    %144 = vmatmul.f32.gmra.mxu0 %v123
    %v145 = vpop.f32.mrf.mxu0
    %v146 = vadd.f32 0.0, %v145
    %147 = vmatmul.f32.gmra.mxu0 %v126
    %v148 = vpop.f32.mrf.mxu0
    %v149 = vadd.f32 0.0, %v148
    %150 = vdwg.mxu0
    %vm151 = vcmp.gt.f32.partialorder %v146, 0.5
    %vm152 = vcmp.gt.f32.partialorder %v149, 0.5
    %vm153 = vmand %vm115, %vm151
    %vm154 = vmand %vm116, %vm152
    %v155 = vsel %vm153, 0.0, -1e+09
    %v156 = vsel %vm154, 0.0, -1e+09
    %v157 = vld [vmem:[%s3] sm:$0xff]
    %v158 = vld [vmem:[%s3 + $0x8] sm:$0xff]
    %v159 = vmul.f32 %v90, 0.083333336
    %v160 = vfloor.f32 %v159
    %vm161 = vcmp.eq.f32.partialorder %v113, %v160
    %vm162 = vcmp.eq.f32.partialorder %v114, %v160
    %v163 = vmul.f32 %v160, 12.0
    %v164 = vsub.f32 %v89, %v163
    %vm165 = vcmp.eq.f32.partialorder %v164, %v55
    %vm166 = vcmp.eq.f32.partialorder %v164, %v56
    %v167 = vsel %vm165, 1.0, 0.0
    %v168 = vsel %vm166, 1.0, 0.0
    %vm169 = vcmask 97280
    %v171 = vsel %vm169, %v157, 0
    %v174 = vsel %vm169, %v158, 0
    %vm176 = vcmask 1043456
    %v178 = vsel %vm176, %v168, 0
    %180 = vmatpush.msra.mxu0 0.0
    %181 = vmatpush.msra.mxu0 0.0
    %182 = vmatpush.msra.mxu0 0.0
    %183 = vmatpush.msra.mxu0 0.0
    %184 = vmatpush.msra.mxu0 0.0
    %185 = vmatpush.msra.mxu0 0.0
    %186 = vmatpush.msra.mxu0 0.0
    %187 = vmatpush.msra.mxu0 0.0
    %188 = vmatpush.msra.mxu0 0.0
    %189 = vmatpush.msra.mxu0 0.0
    %190 = vmatpush.msra.mxu0 0.0
    %191 = vmatpush.msra.mxu0 0.0
    %192 = vmatpush.msra.mxu0 0.0
    %193 = vmatpush.msra.mxu0 0.0
    %194 = vmatpush.msra.mxu0 %v178
    %195 = vmatpush.msra.mxu0 %v167
    %196 = vmatmul.f32.gmra.mxu0 %v171
    %v197 = vpop.f32.mrf.mxu0
    %v198 = vadd.f32 0.0, %v197
    %199 = vmatmul.f32.gmra.mxu0 %v174
    %v200 = vpop.f32.mrf.mxu0
    %v201 = vadd.f32 0.0, %v200
    %202 = vdwg.mxu0
    %vm203 = vcmp.gt.f32.partialorder %v198, 0.5
    %vm204 = vcmp.gt.f32.partialorder %v201, 0.5
    %vm205 = vmand %vm161, %vm203
    %vm206 = vmand %vm162, %vm204
    %v207 = vsel %vm205, 0.0, -1e+09
    %v208 = vsel %vm206, 0.0, -1e+09
    %vm209 = vcmask 261120
    %v210 = vsel %vm209, %v27, 0.0
    %211 = vadd.xlane.f32.xlu0 %v210
    %v212 = vpop.xlane.xlu0 %211
    %v213 = vsel %vm209, %v28, 0.0
    %214 = vadd.xlane.f32.xlu0 %v213
    %v215 = vpop.xlane.xlu0 %214
    %v216 = vrcp.pop 32.0
    %v217 = vmul.f32 32.0, %v216
    %v218 = vsub.f32 1.0, %v217
    %v219 = vmul.f32 %v216, %v218
    %v220 = vadd.f32 %v216, %v219
    %vm221 = vweird.f32 %v216
    %v222 = vsel %vm221, %v216, %v220
    %v223 = vmul.f32 %v212, %v222
    %v224 = vmul.f32 %v215, %v222
    %v225 = vsub.f32 %v27, %v223
    %v226 = vsub.f32 %v28, %v224
    %v227 = vmul.f32 %v225, %v225
    %v228 = vmul.f32 %v226, %v226
    %v229 = vsel %vm209, %v227, 0.0
    %230 = vadd.xlane.f32.xlu0 %v229
    %v231 = vpop.xlane.xlu0 %230
    %v232 = vsel %vm209, %v228, 0.0
    %233 = vadd.xlane.f32.xlu0 %v232
    %v234 = vpop.xlane.xlu0 %233
    %v235 = vmul.f32 %v231, %v222
    %v236 = vmul.f32 %v234, %v222
    %v237 = vadd.f32 %v235, 1e-05
    %v238 = vadd.f32 %v236, 1e-05
    %v239 = vrsqrt.pop %v237
    %v240 = vmul.f32 %v239, %v237
    %v241 = vmul.f32 %v240, %v239
    %v242 = vmul.f32 0.5, %v241
    %v243 = vsub.f32 1.5, %v242
    %v244 = vmul.f32 %v239, %v243
    %vm245 = vweird.f32 %v237
    %vm246 = vweird.f32 %v239
    %vm247 = vmor %vm245, %vm246
    %v248 = vsel %vm247, %v239, %v244
    %v249 = vrsqrt.pop %v238
    %v250 = vmul.f32 %v249, %v238
    %v251 = vmul.f32 %v250, %v249
    %v252 = vmul.f32 0.5, %v251
    %v253 = vsub.f32 1.5, %v252
    %v254 = vmul.f32 %v249, %v253
    %vm255 = vweird.f32 %v238
    %vm256 = vweird.f32 %v249
    %vm257 = vmor %vm255, %vm256
    %v258 = vsel %vm257, %v249, %v254
    %v259 = vmul.f32 %v225, %v248
    %v260 = vmul.f32 %v226, %v258
    %v261 = vperm.slane %v44, 0
    %v262 = vmul.f32 %v259, %v261
    %v263 = vmul.f32 %v260, %v261
    %v264 = vperm.slane %v44, 1
    %v265 = vadd.f32 %v262, %v264
    %v266 = vadd.f32 %v263, %v264
    %v267 = vperm.slane %v44, 6
    %v269 = vsel %vm209, %v265, 0
    %v272 = vsel %vm209, %v266, 0
    %274 = vmatpush.msra.mxu0 0.0
    %275 = vmatpush.msra.mxu0 0.0
    %276 = vmatpush.msra.mxu0 0.0
    %277 = vmatpush.msra.mxu0 0.0
    %278 = vmatpush.msra.mxu0 0.0
    %279 = vmatpush.msra.mxu0 0.0
    %280 = vmatpush.msra.mxu0 0.0
    %281 = vmatpush.msra.mxu0 0.0
    %282 = vmatpush.msra.mxu0 0.0
    %283 = vmatpush.msra.mxu0 0.0
    %284 = vmatpush.msra.mxu0 0.0
    %285 = vmatpush.msra.mxu0 0.0
    %286 = vmatpush.msra.mxu0 %v41
    %287 = vmatpush.msra.mxu0 %v38
    %288 = vmatpush.msra.mxu0 %v35
    %289 = vmatpush.msra.mxu0 %v32
    %290 = vmatmul.f32.gmra.mxu0 %v269
    %v291 = vpop.f32.mrf.mxu0
    %v292 = vadd.f32 %v267, %v291
    %293 = vmatmul.f32.gmra.mxu0 %v272
    %v294 = vpop.f32.mrf.mxu0
    %v295 = vadd.f32 %v267, %v294
    %296 = vdwg.mxu0
    %v297 = vmul.f32 %v292, %v101
    %v298 = vmul.f32 %v295, %v102
    %v299 = vmul.f32 %v292, %v103
    %v300 = vmul.f32 %v295, %v104
    %v301 = vmul.f32 %v292, %v105
    %v302 = vmul.f32 %v295, %v106
    %v303 = vmul.f32 %v292, %v107
    %v304 = vmul.f32 %v295, %v108
    %307 = vrot.lane.b32.xlu0 %v292, 96
    %v308 = vpop.permute.xlu0 %307
    %309 = vrot.lane.b32.xlu0 %v295, 96
    %v310 = vpop.permute.xlu0 %309
    %v312 = vsel %vm209, %v297, 0
    %v315 = vsel %vm209, %v298, 0
    %v318 = vsel %vm209, %v299, 0
    %v321 = vsel %vm209, %v300, 0
    %v324 = vsel %vm209, %v301, 0
    %v327 = vsel %vm209, %v302, 0
    %v330 = vsel %vm209, %v303, 0
    %v333 = vsel %vm209, %v304, 0
    %v335 = vsel %vm209, %v308, 0
    %v337 = vsel %vm209, %v310, 0
    %339 = vmatpush.xpose.msra.mxu0 0.0
    %340 = vmatpush.xpose.msra.mxu0 0.0
    %341 = vmatpush.xpose.msra.mxu0 0.0
    %342 = vmatpush.xpose.msra.mxu0 0.0
    %343 = vmatpush.xpose.msra.mxu0 0.0
    %344 = vmatpush.xpose.msra.mxu0 0.0
    %345 = vmatpush.xpose.msra.mxu0 0.0
    %346 = vmatpush.xpose.msra.mxu0 0.0
    %347 = vmatpush.xpose.msra.mxu0 0.0
    %348 = vmatpush.xpose.msra.mxu0 0.0
    %349 = vmatpush.xpose.msra.mxu0 0.0
    %350 = vmatpush.xpose.msra.mxu0 0.0
    %351 = vmatpush.xpose.msra.mxu0 0.0
    %352 = vmatpush.xpose.msra.mxu0 0.0
    %353 = vmatpush.xpose.msra.mxu0 %v337
    %354 = vmatpush.xpose.msra.mxu0 %v335
    %355 = vmatmul.f32.gmra.mxu0 %v312
    %v356 = vpop.f32.mrf.mxu0
    %v357 = vadd.f32 %v155, %v356
    %358 = vmatmul.f32.gmra.mxu0 %v315
    %v359 = vpop.f32.mrf.mxu0
    %v360 = vadd.f32 %v156, %v359
    %361 = vmatmul.f32.gmra.mxu0 %v318
    %v362 = vpop.f32.mrf.mxu0
    %v363 = vadd.f32 %v155, %v362
    %364 = vmatmul.f32.gmra.mxu0 %v321
    %v365 = vpop.f32.mrf.mxu0
    %v366 = vadd.f32 %v156, %v365
    %367 = vmatmul.f32.gmra.mxu0 %v324
    %v368 = vpop.f32.mrf.mxu0
    %v369 = vadd.f32 %v155, %v368
    %370 = vmatmul.f32.gmra.mxu0 %v327
    %v371 = vpop.f32.mrf.mxu0
    %v372 = vadd.f32 %v156, %v371
    %373 = vmatmul.f32.gmra.mxu0 %v330
    %v374 = vpop.f32.mrf.mxu0
    %v375 = vadd.f32 %v155, %v374
    %376 = vmatmul.f32.gmra.mxu0 %v333
    %v377 = vpop.f32.mrf.mxu0
    %v378 = vadd.f32 %v156, %v377
    %379 = vdwg.mxu0
    %vm380 = vcmask 130048
    %v381 = vsel %vm380, %v357, -inf
    %382 = vmax.xlane.f32.xlu0 %v381
    %v383 = vpop.xlane.xlu0 %382
    %v384 = vsel %vm380, %v360, -inf
    %385 = vmax.xlane.f32.xlu0 %v384
    %v386 = vpop.xlane.xlu0 %385
    %v387 = vsel %vm380, %v363, -inf
    %388 = vmax.xlane.f32.xlu0 %v387
    %v389 = vpop.xlane.xlu0 %388
    %v390 = vsel %vm380, %v366, -inf
    %391 = vmax.xlane.f32.xlu0 %v390
    %v392 = vpop.xlane.xlu0 %391
    %v393 = vsel %vm380, %v369, -inf
    %394 = vmax.xlane.f32.xlu0 %v393
    %v395 = vpop.xlane.xlu0 %394
    %v396 = vsel %vm380, %v372, -inf
    %397 = vmax.xlane.f32.xlu0 %v396
    %v398 = vpop.xlane.xlu0 %397
    %v399 = vsel %vm380, %v375, -inf
    %400 = vmax.xlane.f32.xlu0 %v399
    %v401 = vpop.xlane.xlu0 %400
    %v402 = vsel %vm380, %v378, -inf
    %403 = vmax.xlane.f32.xlu0 %v402
    %v404 = vpop.xlane.xlu0 %403
    %v405 = vsub.f32 %v357, %v383
    %v406 = vsub.f32 %v360, %v386
    %v407 = vsub.f32 %v363, %v389
    %v408 = vsub.f32 %v366, %v392
    %v409 = vsub.f32 %v369, %v395
    %v410 = vsub.f32 %v372, %v398
    %v411 = vsub.f32 %v375, %v401
    %v412 = vsub.f32 %v378, %v404
    %v413 = vmul.f32 %v405, 1.442695
    %v414 = vpow.pop %v413
    %v415 = vmul.f32 %v406, 1.442695
    %v416 = vpow.pop %v415
    %v417 = vmul.f32 %v407, 1.442695
    %v418 = vpow.pop %v417
    %v419 = vmul.f32 %v408, 1.442695
    %v420 = vpow.pop %v419
    %v421 = vmul.f32 %v409, 1.442695
    %v422 = vpow.pop %v421
    %v423 = vmul.f32 %v410, 1.442695
    %v424 = vpow.pop %v423
    %v425 = vmul.f32 %v411, 1.442695
    %v426 = vpow.pop %v425
    %v427 = vmul.f32 %v412, 1.442695
    %v428 = vpow.pop %v427
    %v429 = vsel %vm380, %v414, 0.0
    %430 = vadd.xlane.f32.xlu0 %v429
    %v431 = vpop.xlane.xlu0 %430
    %v432 = vsel %vm380, %v416, 0.0
    %433 = vadd.xlane.f32.xlu0 %v432
    %v434 = vpop.xlane.xlu0 %433
    %v435 = vsel %vm380, %v418, 0.0
    %436 = vadd.xlane.f32.xlu0 %v435
    %v437 = vpop.xlane.xlu0 %436
    %v438 = vsel %vm380, %v420, 0.0
    %439 = vadd.xlane.f32.xlu0 %v438
    %v440 = vpop.xlane.xlu0 %439
    %v441 = vsel %vm380, %v422, 0.0
    %442 = vadd.xlane.f32.xlu0 %v441
    %v443 = vpop.xlane.xlu0 %442
    %v444 = vsel %vm380, %v424, 0.0
    %445 = vadd.xlane.f32.xlu0 %v444
    %v446 = vpop.xlane.xlu0 %445
    %v447 = vsel %vm380, %v426, 0.0
    %448 = vadd.xlane.f32.xlu0 %v447
    %v449 = vpop.xlane.xlu0 %448
    %v450 = vsel %vm380, %v428, 0.0
    %451 = vadd.xlane.f32.xlu0 %v450
    %v452 = vpop.xlane.xlu0 %451
    %v453 = vrcp.pop %v431
    %v454 = vrcp.pop %v434
    %v455 = vrcp.pop %v437
    %v456 = vrcp.pop %v440
    %v457 = vrcp.pop %v443
    %v458 = vrcp.pop %v446
    %v459 = vrcp.pop %v449
    %v460 = vrcp.pop %v452
    %v461 = vmul.f32 %v431, %v453
    %v462 = vmul.f32 %v434, %v454
    %v463 = vmul.f32 %v437, %v455
    %v464 = vmul.f32 %v440, %v456
    %v465 = vmul.f32 %v443, %v457
    %v466 = vmul.f32 %v446, %v458
    %v467 = vmul.f32 %v449, %v459
    %v468 = vmul.f32 %v452, %v460
    %v469 = vsub.f32 2.0, %v461
    %v470 = vsub.f32 2.0, %v462
    %v471 = vsub.f32 2.0, %v463
    %v472 = vsub.f32 2.0, %v464
    %v473 = vsub.f32 2.0, %v465
    %v474 = vsub.f32 2.0, %v466
    %v475 = vsub.f32 2.0, %v467
    %v476 = vsub.f32 2.0, %v468
    %v477 = vmul.f32 %v453, %v469
    %v478 = vmul.f32 %v454, %v470
    %v479 = vmul.f32 %v455, %v471
    %v480 = vmul.f32 %v456, %v472
    %v481 = vmul.f32 %v457, %v473
    %v482 = vmul.f32 %v458, %v474
    %v483 = vmul.f32 %v459, %v475
    %v484 = vmul.f32 %v460, %v476
    %v485 = vmul.f32 %v414, %v477
    %v486 = vmul.f32 %v416, %v478
    %v487 = vmul.f32 %v418, %v479
    %v488 = vmul.f32 %v420, %v480
    %v489 = vmul.f32 %v422, %v481
    %v490 = vmul.f32 %v424, %v482
    %v491 = vmul.f32 %v426, %v483
    %v492 = vmul.f32 %v428, %v484
    %493 = vrot.lane.b32.xlu0 %v292, 64
    %v494 = vpop.permute.xlu0 %493
    %495 = vrot.lane.b32.xlu0 %v295, 64
    %v496 = vpop.permute.xlu0 %495
    %v500 = vsel %vm380, %v485, 0
    %v503 = vsel %vm380, %v486, 0
    %v506 = vsel %vm380, %v487, 0
    %v509 = vsel %vm380, %v488, 0
    %v512 = vsel %vm380, %v489, 0
    %v515 = vsel %vm380, %v490, 0
    %v518 = vsel %vm380, %v491, 0
    %v521 = vsel %vm380, %v492, 0
    %523 = vmatpush.msra.mxu0 0.0
    %524 = vmatpush.msra.mxu0 0.0
    %525 = vmatpush.msra.mxu0 0.0
    %526 = vmatpush.msra.mxu0 0.0
    %527 = vmatpush.msra.mxu0 0.0
    %528 = vmatpush.msra.mxu0 0.0
    %529 = vmatpush.msra.mxu0 0.0
    %530 = vmatpush.msra.mxu0 0.0
    %531 = vmatpush.msra.mxu0 0.0
    %532 = vmatpush.msra.mxu0 0.0
    %533 = vmatpush.msra.mxu0 0.0
    %534 = vmatpush.msra.mxu0 0.0
    %535 = vmatpush.msra.mxu0 0.0
    %536 = vmatpush.msra.mxu0 0.0
    %537 = vmatpush.msra.mxu0 %v496
    %538 = vmatpush.msra.mxu0 %v494
    %539 = vmatmul.f32.gmra.mxu0 %v500
    %v540 = vpop.f32.mrf.mxu0
    %v541 = vadd.f32 0.0, %v540
    %542 = vmatmul.f32.gmra.mxu0 %v503
    %v543 = vpop.f32.mrf.mxu0
    %v544 = vadd.f32 0.0, %v543
    %545 = vmatmul.f32.gmra.mxu0 %v506
    %v546 = vpop.f32.mrf.mxu0
    %v547 = vadd.f32 0.0, %v546
    %548 = vmatmul.f32.gmra.mxu0 %v509
    %v549 = vpop.f32.mrf.mxu0
    %v550 = vadd.f32 0.0, %v549
    %551 = vmatmul.f32.gmra.mxu0 %v512
    %v552 = vpop.f32.mrf.mxu0
    %v553 = vadd.f32 0.0, %v552
    %554 = vmatmul.f32.gmra.mxu0 %v515
    %v555 = vpop.f32.mrf.mxu0
    %v556 = vadd.f32 0.0, %v555
    %557 = vmatmul.f32.gmra.mxu0 %v518
    %v558 = vpop.f32.mrf.mxu0
    %v559 = vadd.f32 0.0, %v558
    %560 = vmatmul.f32.gmra.mxu0 %v521
    %v561 = vpop.f32.mrf.mxu0
    %v562 = vadd.f32 0.0, %v561
    %563 = vdwg.mxu0
    %v564 = vmul.f32 %v541, %v101
    %v565 = vmul.f32 %v544, %v102
    %v566 = vmul.f32 %v547, %v103
    %v567 = vmul.f32 %v550, %v104
    %v568 = vmul.f32 %v553, %v105
    %v569 = vmul.f32 %v556, %v106
    %v570 = vmul.f32 %v559, %v107
    %v571 = vmul.f32 %v562, %v108
    %v572 = vadd.f32 %v564, %v566
    %v573 = vadd.f32 %v565, %v567
    %v574 = vadd.f32 %v572, %v568
    %v575 = vadd.f32 %v573, %v569
    %v576 = vadd.f32 %v574, %v570
    %v577 = vadd.f32 %v575, %v571
    %v578 = vperm.slane %v44, 7
    %583 = vrot.lane.b32.xlu0 %v32, 32
    %v584 = vpop.permute.xlu0 %583
    %585 = vrot.lane.b32.xlu0 %v35, 32
    %v586 = vpop.permute.xlu0 %585
    %587 = vrot.lane.b32.xlu0 %v38, 32
    %v588 = vpop.permute.xlu0 %587
    %589 = vrot.lane.b32.xlu0 %v41, 32
    %v590 = vpop.permute.xlu0 %589
    %v596 = vsel %vm209, %v576, 0
    %v599 = vsel %vm209, %v577, 0
    %601 = vmatpush.msra.mxu0 0.0
    %602 = vmatpush.msra.mxu0 0.0
    %603 = vmatpush.msra.mxu0 0.0
    %604 = vmatpush.msra.mxu0 0.0
    %605 = vmatpush.msra.mxu0 0.0
    %606 = vmatpush.msra.mxu0 0.0
    %607 = vmatpush.msra.mxu0 0.0
    %608 = vmatpush.msra.mxu0 0.0
    %609 = vmatpush.msra.mxu0 0.0
    %610 = vmatpush.msra.mxu0 0.0
    %611 = vmatpush.msra.mxu0 0.0
    %612 = vmatpush.msra.mxu0 0.0
    %613 = vmatpush.msra.mxu0 %v590
    %614 = vmatpush.msra.mxu0 %v588
    %615 = vmatpush.msra.mxu0 %v586
    %616 = vmatpush.msra.mxu0 %v584
    %617 = vmatmul.f32.gmra.mxu0 %v596
    %v618 = vpop.f32.mrf.mxu0
    %v619 = vadd.f32 %v578, %v618
    %620 = vmatmul.f32.gmra.mxu0 %v599
    %v621 = vpop.f32.mrf.mxu0
    %v622 = vadd.f32 %v578, %v621
    %623 = vdwg.mxu0
    %v624 = vadd.f32 %v27, %v619
    %v625 = vadd.f32 %v28, %v622
    %v626 = vsel %vm209, %v624, 0.0
    %627 = vadd.xlane.f32.xlu0 %v626
    %v628 = vpop.xlane.xlu0 %627
    %v629 = vsel %vm209, %v625, 0.0
    %630 = vadd.xlane.f32.xlu0 %v629
    %v631 = vpop.xlane.xlu0 %630
    %v632 = vmul.f32 %v628, %v222
    %v633 = vmul.f32 %v631, %v222
    %v634 = vsub.f32 %v624, %v632
    %v635 = vsub.f32 %v625, %v633
    %v636 = vmul.f32 %v634, %v634
    %v637 = vmul.f32 %v635, %v635
    %v638 = vsel %vm209, %v636, 0.0
    %639 = vadd.xlane.f32.xlu0 %v638
    %v640 = vpop.xlane.xlu0 %639
    %v641 = vsel %vm209, %v637, 0.0
    %642 = vadd.xlane.f32.xlu0 %v641
    %v643 = vpop.xlane.xlu0 %642
    %v644 = vmul.f32 %v640, %v222
    %v645 = vmul.f32 %v643, %v222
    %v646 = vadd.f32 %v644, 1e-05
    %v647 = vadd.f32 %v645, 1e-05
    %v648 = vrsqrt.pop %v646
    %v649 = vmul.f32 %v648, %v646
    %v650 = vmul.f32 %v649, %v648
    %v651 = vmul.f32 0.5, %v650
    %v652 = vsub.f32 1.5, %v651
    %v653 = vmul.f32 %v648, %v652
    %vm654 = vweird.f32 %v646
    %vm655 = vweird.f32 %v648
    %vm656 = vmor %vm654, %vm655
    %v657 = vsel %vm656, %v648, %v653
    %v658 = vrsqrt.pop %v647
    %v659 = vmul.f32 %v658, %v647
    %v660 = vmul.f32 %v659, %v658
    %v661 = vmul.f32 0.5, %v660
    %v662 = vsub.f32 1.5, %v661
    %v663 = vmul.f32 %v658, %v662
    %vm664 = vweird.f32 %v647
    %vm665 = vweird.f32 %v658
    %vm666 = vmor %vm664, %vm665
    %v667 = vsel %vm666, %v658, %v663
    %v668 = vmul.f32 %v634, %v657
    %v669 = vmul.f32 %v635, %v667
    %v670 = vperm.slane %v44, 2
    %v671 = vmul.f32 %v668, %v670
    %v672 = vmul.f32 %v669, %v670
    %v673 = vperm.slane %v44, 3
    %v674 = vadd.f32 %v671, %v673
    %v675 = vadd.f32 %v672, %v673
    %v676 = vperm.slane %v45, 0
    %v678 = vsel %vm209, %v674, 0
    %v681 = vsel %vm209, %v675, 0
    %683 = vmatpush.msra.mxu0 0.0
    %684 = vmatpush.msra.mxu0 0.0
    %685 = vmatpush.msra.mxu0 0.0
    %686 = vmatpush.msra.mxu0 0.0
    %687 = vmatpush.msra.mxu0 0.0
    %688 = vmatpush.msra.mxu0 0.0
    %689 = vmatpush.msra.mxu0 0.0
    %690 = vmatpush.msra.mxu0 0.0
    %691 = vmatpush.msra.mxu0 0.0
    %692 = vmatpush.msra.mxu0 0.0
    %693 = vmatpush.msra.mxu0 0.0
    %694 = vmatpush.msra.mxu0 0.0
    %695 = vmatpush.msra.mxu0 %v42
    %696 = vmatpush.msra.mxu0 %v39
    %697 = vmatpush.msra.mxu0 %v36
    %698 = vmatpush.msra.mxu0 %v33
    %699 = vmatmul.f32.gmra.mxu0 %v678
    %v700 = vpop.f32.mrf.mxu0
    %v701 = vadd.f32 %v676, %v700
    %702 = vmatmul.f32.gmra.mxu0 %v681
    %v703 = vpop.f32.mrf.mxu0
    %v704 = vadd.f32 %v676, %v703
    %705 = vdwg.mxu0
    %v706 = vperm.slane %v45, 1
    %711 = vrot.lane.b32.xlu0 %v33, 96
    %v712 = vpop.permute.xlu0 %711
    %713 = vrot.lane.b32.xlu0 %v36, 96
    %v714 = vpop.permute.xlu0 %713
    %715 = vrot.lane.b32.xlu0 %v39, 96
    %v716 = vpop.permute.xlu0 %715
    %717 = vrot.lane.b32.xlu0 %v42, 96
    %v718 = vpop.permute.xlu0 %717
    %v724 = vsel %vm209, %v29, 0
    %v727 = vsel %vm209, %v30, 0
    %v730 = vsel %vm209, %v31, 0
    %732 = vmatpush.msra.mxu0 0.0
    %733 = vmatpush.msra.mxu0 0.0
    %734 = vmatpush.msra.mxu0 0.0
    %735 = vmatpush.msra.mxu0 0.0
    %736 = vmatpush.msra.mxu0 0.0
    %737 = vmatpush.msra.mxu0 0.0
    %738 = vmatpush.msra.mxu0 0.0
    %739 = vmatpush.msra.mxu0 0.0
    %740 = vmatpush.msra.mxu0 0.0
    %741 = vmatpush.msra.mxu0 0.0
    %742 = vmatpush.msra.mxu0 0.0
    %743 = vmatpush.msra.mxu0 0.0
    %744 = vmatpush.msra.mxu0 %v718
    %745 = vmatpush.msra.mxu0 %v716
    %746 = vmatpush.msra.mxu0 %v714
    %747 = vmatpush.msra.mxu0 %v712
    %748 = vmatmul.f32.gmra.mxu0 %v724
    %v749 = vpop.f32.mrf.mxu0
    %v750 = vadd.f32 %v706, %v749
    %751 = vmatmul.f32.gmra.mxu0 %v727
    %v752 = vpop.f32.mrf.mxu0
    %v753 = vadd.f32 %v706, %v752
    %754 = vmatmul.f32.gmra.mxu0 %v730
    %v755 = vpop.f32.mrf.mxu0
    %v756 = vadd.f32 %v706, %v755
    %757 = vdwg.mxu0
    %v758 = vmul.f32 %v701, %v101
    %v759 = vmul.f32 %v704, %v102
    %v760 = vmul.f32 %v701, %v103
    %v761 = vmul.f32 %v704, %v104
    %v762 = vmul.f32 %v701, %v105
    %v763 = vmul.f32 %v704, %v106
    %v764 = vmul.f32 %v701, %v107
    %v765 = vmul.f32 %v704, %v108
    %v767 = vsel %vm209, %v758, 0
    %v770 = vsel %vm209, %v759, 0
    %v773 = vsel %vm209, %v760, 0
    %v776 = vsel %vm209, %v761, 0
    %v779 = vsel %vm209, %v762, 0
    %v782 = vsel %vm209, %v763, 0
    %v785 = vsel %vm209, %v764, 0
    %v788 = vsel %vm209, %v765, 0
    %v791 = vsel %vm209, %v750, 0
    %v794 = vsel %vm209, %v753, 0
    %v797 = vsel %vm209, %v756, 0
    %799 = vmatpush.xpose.msra.mxu0 0.0
    %800 = vmatpush.xpose.msra.mxu0 0.0
    %801 = vmatpush.xpose.msra.mxu0 0.0
    %802 = vmatpush.xpose.msra.mxu0 0.0
    %803 = vmatpush.xpose.msra.mxu0 0.0
    %804 = vmatpush.xpose.msra.mxu0 0.0
    %805 = vmatpush.xpose.msra.mxu0 0.0
    %806 = vmatpush.xpose.msra.mxu0 0.0
    %807 = vmatpush.xpose.msra.mxu0 0.0
    %808 = vmatpush.xpose.msra.mxu0 0.0
    %809 = vmatpush.xpose.msra.mxu0 0.0
    %810 = vmatpush.xpose.msra.mxu0 0.0
    %811 = vmatpush.xpose.msra.mxu0 0.0
    %812 = vmatpush.xpose.msra.mxu0 %v797
    %813 = vmatpush.xpose.msra.mxu0 %v794
    %814 = vmatpush.xpose.msra.mxu0 %v791
    %815 = vmatmul.f32.gmra.mxu0 %v767
    %v816 = vpop.f32.mrf.mxu0
    %v817 = vadd.f32 %v207, %v816
    %818 = vmatmul.f32.gmra.mxu0 %v770
    %v819 = vpop.f32.mrf.mxu0
    %v820 = vadd.f32 %v208, %v819
    %821 = vmatmul.f32.gmra.mxu0 %v773
    %v822 = vpop.f32.mrf.mxu0
    %v823 = vadd.f32 %v207, %v822
    %824 = vmatmul.f32.gmra.mxu0 %v776
    %v825 = vpop.f32.mrf.mxu0
    %v826 = vadd.f32 %v208, %v825
    %827 = vmatmul.f32.gmra.mxu0 %v779
    %v828 = vpop.f32.mrf.mxu0
    %v829 = vadd.f32 %v207, %v828
    %830 = vmatmul.f32.gmra.mxu0 %v782
    %v831 = vpop.f32.mrf.mxu0
    %v832 = vadd.f32 %v208, %v831
    %833 = vmatmul.f32.gmra.mxu0 %v785
    %v834 = vpop.f32.mrf.mxu0
    %v835 = vadd.f32 %v207, %v834
    %836 = vmatmul.f32.gmra.mxu0 %v788
    %v837 = vpop.f32.mrf.mxu0
    %v838 = vadd.f32 %v208, %v837
    %839 = vdwg.mxu0
    %vm840 = vcmask 195584
    %v841 = vsel %vm840, %v817, -inf
    %842 = vmax.xlane.f32.xlu0 %v841
    %v843 = vpop.xlane.xlu0 %842
    %v844 = vsel %vm840, %v820, -inf
    %845 = vmax.xlane.f32.xlu0 %v844
    %v846 = vpop.xlane.xlu0 %845
    %v847 = vsel %vm840, %v823, -inf
    %848 = vmax.xlane.f32.xlu0 %v847
    %v849 = vpop.xlane.xlu0 %848
    %v850 = vsel %vm840, %v826, -inf
    %851 = vmax.xlane.f32.xlu0 %v850
    %v852 = vpop.xlane.xlu0 %851
    %v853 = vsel %vm840, %v829, -inf
    %854 = vmax.xlane.f32.xlu0 %v853
    %v855 = vpop.xlane.xlu0 %854
    %v856 = vsel %vm840, %v832, -inf
    %857 = vmax.xlane.f32.xlu0 %v856
    %v858 = vpop.xlane.xlu0 %857
    %v859 = vsel %vm840, %v835, -inf
    %860 = vmax.xlane.f32.xlu0 %v859
    %v861 = vpop.xlane.xlu0 %860
    %v862 = vsel %vm840, %v838, -inf
    %863 = vmax.xlane.f32.xlu0 %v862
    %v864 = vpop.xlane.xlu0 %863
    %v865 = vsub.f32 %v817, %v843
    %v866 = vsub.f32 %v820, %v846
    %v867 = vsub.f32 %v823, %v849
    %v868 = vsub.f32 %v826, %v852
    %v869 = vsub.f32 %v829, %v855
    %v870 = vsub.f32 %v832, %v858
    %v871 = vsub.f32 %v835, %v861
    %v872 = vsub.f32 %v838, %v864
    %v873 = vmul.f32 %v865, 1.442695
    %v874 = vpow.pop %v873
    %v875 = vmul.f32 %v866, 1.442695
    %v876 = vpow.pop %v875
    %v877 = vmul.f32 %v867, 1.442695
    %v878 = vpow.pop %v877
    %v879 = vmul.f32 %v868, 1.442695
    %v880 = vpow.pop %v879
    %v881 = vmul.f32 %v869, 1.442695
    %v882 = vpow.pop %v881
    %v883 = vmul.f32 %v870, 1.442695
    %v884 = vpow.pop %v883
    %v885 = vmul.f32 %v871, 1.442695
    %v886 = vpow.pop %v885
    %v887 = vmul.f32 %v872, 1.442695
    %v888 = vpow.pop %v887
    %v889 = vsel %vm840, %v874, 0.0
    %890 = vadd.xlane.f32.xlu0 %v889
    %v891 = vpop.xlane.xlu0 %890
    %v892 = vsel %vm840, %v876, 0.0
    %893 = vadd.xlane.f32.xlu0 %v892
    %v894 = vpop.xlane.xlu0 %893
    %v895 = vsel %vm840, %v878, 0.0
    %896 = vadd.xlane.f32.xlu0 %v895
    %v897 = vpop.xlane.xlu0 %896
    %v898 = vsel %vm840, %v880, 0.0
    %899 = vadd.xlane.f32.xlu0 %v898
    %v900 = vpop.xlane.xlu0 %899
    %v901 = vsel %vm840, %v882, 0.0
    %902 = vadd.xlane.f32.xlu0 %v901
    %v903 = vpop.xlane.xlu0 %902
    %v904 = vsel %vm840, %v884, 0.0
    %905 = vadd.xlane.f32.xlu0 %v904
    %v906 = vpop.xlane.xlu0 %905
    %v907 = vsel %vm840, %v886, 0.0
    %908 = vadd.xlane.f32.xlu0 %v907
    %v909 = vpop.xlane.xlu0 %908
    %v910 = vsel %vm840, %v888, 0.0
    %911 = vadd.xlane.f32.xlu0 %v910
    %v912 = vpop.xlane.xlu0 %911
    %v913 = vrcp.pop %v891
    %v914 = vrcp.pop %v894
    %v915 = vrcp.pop %v897
    %v916 = vrcp.pop %v900
    %v917 = vrcp.pop %v903
    %v918 = vrcp.pop %v906
    %v919 = vrcp.pop %v909
    %v920 = vrcp.pop %v912
    %v921 = vmul.f32 %v891, %v913
    %v922 = vmul.f32 %v894, %v914
    %v923 = vmul.f32 %v897, %v915
    %v924 = vmul.f32 %v900, %v916
    %v925 = vmul.f32 %v903, %v917
    %v926 = vmul.f32 %v906, %v918
    %v927 = vmul.f32 %v909, %v919
    %v928 = vmul.f32 %v912, %v920
    %v929 = vsub.f32 2.0, %v921
    %v930 = vsub.f32 2.0, %v922
    %v931 = vsub.f32 2.0, %v923
    %v932 = vsub.f32 2.0, %v924
    %v933 = vsub.f32 2.0, %v925
    %v934 = vsub.f32 2.0, %v926
    %v935 = vsub.f32 2.0, %v927
    %v936 = vsub.f32 2.0, %v928
    %v937 = vmul.f32 %v913, %v929
    %v938 = vmul.f32 %v914, %v930
    %v939 = vmul.f32 %v915, %v931
    %v940 = vmul.f32 %v916, %v932
    %v941 = vmul.f32 %v917, %v933
    %v942 = vmul.f32 %v918, %v934
    %v943 = vmul.f32 %v919, %v935
    %v944 = vmul.f32 %v920, %v936
    %v945 = vmul.f32 %v874, %v937
    %v946 = vmul.f32 %v876, %v938
    %v947 = vmul.f32 %v878, %v939
    %v948 = vmul.f32 %v880, %v940
    %v949 = vmul.f32 %v882, %v941
    %v950 = vmul.f32 %v884, %v942
    %v951 = vmul.f32 %v886, %v943
    %v952 = vmul.f32 %v888, %v944
    %953 = vrot.lane.b32.xlu0 %v750, 96
    %v954 = vpop.permute.xlu0 %953
    %955 = vrot.lane.b32.xlu0 %v753, 96
    %v956 = vpop.permute.xlu0 %955
    %957 = vrot.lane.b32.xlu0 %v756, 96
    %v958 = vpop.permute.xlu0 %957
    %v963 = vsel %vm840, %v945, 0
    %v966 = vsel %vm840, %v946, 0
    %v969 = vsel %vm840, %v947, 0
    %v972 = vsel %vm840, %v948, 0
    %v975 = vsel %vm840, %v949, 0
    %v978 = vsel %vm840, %v950, 0
    %v981 = vsel %vm840, %v951, 0
    %v984 = vsel %vm840, %v952, 0
    %986 = vmatpush.msra.mxu0 0.0
    %987 = vmatpush.msra.mxu0 0.0
    %988 = vmatpush.msra.mxu0 0.0
    %989 = vmatpush.msra.mxu0 0.0
    %990 = vmatpush.msra.mxu0 0.0
    %991 = vmatpush.msra.mxu0 0.0
    %992 = vmatpush.msra.mxu0 0.0
    %993 = vmatpush.msra.mxu0 0.0
    %994 = vmatpush.msra.mxu0 0.0
    %995 = vmatpush.msra.mxu0 0.0
    %996 = vmatpush.msra.mxu0 0.0
    %997 = vmatpush.msra.mxu0 0.0
    %998 = vmatpush.msra.mxu0 0.0
    %999 = vmatpush.msra.mxu0 %v958
    %1000 = vmatpush.msra.mxu0 %v956
    %1001 = vmatpush.msra.mxu0 %v954
    %1002 = vmatmul.f32.gmra.mxu0 %v963
    %v1003 = vpop.f32.mrf.mxu0
    %v1004 = vadd.f32 0.0, %v1003
    %1005 = vmatmul.f32.gmra.mxu0 %v966
    %v1006 = vpop.f32.mrf.mxu0
    %v1007 = vadd.f32 0.0, %v1006
    %1008 = vmatmul.f32.gmra.mxu0 %v969
    %v1009 = vpop.f32.mrf.mxu0
    %v1010 = vadd.f32 0.0, %v1009
    %1011 = vmatmul.f32.gmra.mxu0 %v972
    %v1012 = vpop.f32.mrf.mxu0
    %v1013 = vadd.f32 0.0, %v1012
    %1014 = vmatmul.f32.gmra.mxu0 %v975
    %v1015 = vpop.f32.mrf.mxu0
    %v1016 = vadd.f32 0.0, %v1015
    %1017 = vmatmul.f32.gmra.mxu0 %v978
    %v1018 = vpop.f32.mrf.mxu0
    %v1019 = vadd.f32 0.0, %v1018
    %1020 = vmatmul.f32.gmra.mxu0 %v981
    %v1021 = vpop.f32.mrf.mxu0
    %v1022 = vadd.f32 0.0, %v1021
    %1023 = vmatmul.f32.gmra.mxu0 %v984
    %v1024 = vpop.f32.mrf.mxu0
    %v1025 = vadd.f32 0.0, %v1024
    %1026 = vdwg.mxu0
    %v1027 = vmul.f32 %v1004, %v101
    %v1028 = vmul.f32 %v1007, %v102
    %v1029 = vmul.f32 %v1010, %v103
    %v1030 = vmul.f32 %v1013, %v104
    %v1031 = vmul.f32 %v1016, %v105
    %v1032 = vmul.f32 %v1019, %v106
    %v1033 = vmul.f32 %v1022, %v107
    %v1034 = vmul.f32 %v1025, %v108
    %v1035 = vadd.f32 %v1027, %v1029
    %v1036 = vadd.f32 %v1028, %v1030
    %v1037 = vadd.f32 %v1035, %v1031
    %v1038 = vadd.f32 %v1036, %v1032
    %v1039 = vadd.f32 %v1037, %v1033
    %v1040 = vadd.f32 %v1038, %v1034
    %v1041 = vperm.slane %v45, 2
    %1042 = vrot.lane.b32.xlu0 %v33, 32
    %v1043 = vpop.permute.xlu0 %1042
    %1044 = vrot.lane.b32.xlu0 %v36, 32
    %v1045 = vpop.permute.xlu0 %1044
    %1046 = vrot.lane.b32.xlu0 %v39, 32
    %v1047 = vpop.permute.xlu0 %1046
    %1048 = vrot.lane.b32.xlu0 %v42, 32
    %v1049 = vpop.permute.xlu0 %1048
    %v1055 = vsel %vm209, %v1039, 0
    %v1058 = vsel %vm209, %v1040, 0
    %1060 = vmatpush.msra.mxu0 0.0
    %1061 = vmatpush.msra.mxu0 0.0
    %1062 = vmatpush.msra.mxu0 0.0
    %1063 = vmatpush.msra.mxu0 0.0
    %1064 = vmatpush.msra.mxu0 0.0
    %1065 = vmatpush.msra.mxu0 0.0
    %1066 = vmatpush.msra.mxu0 0.0
    %1067 = vmatpush.msra.mxu0 0.0
    %1068 = vmatpush.msra.mxu0 0.0
    %1069 = vmatpush.msra.mxu0 0.0
    %1070 = vmatpush.msra.mxu0 0.0
    %1071 = vmatpush.msra.mxu0 0.0
    %1072 = vmatpush.msra.mxu0 %v1049
    %1073 = vmatpush.msra.mxu0 %v1047
    %1074 = vmatpush.msra.mxu0 %v1045
    %1075 = vmatpush.msra.mxu0 %v1043
    %1076 = vmatmul.f32.gmra.mxu0 %v1055
    %v1077 = vpop.f32.mrf.mxu0
    %v1078 = vadd.f32 %v1041, %v1077
    %1079 = vmatmul.f32.gmra.mxu0 %v1058
    %v1080 = vpop.f32.mrf.mxu0
    %v1081 = vadd.f32 %v1041, %v1080
    %1082 = vdwg.mxu0
    %v1083 = vadd.f32 %v624, %v1078
    %v1084 = vadd.f32 %v625, %v1081
    %v1085 = vsel %vm209, %v1083, 0.0
    %1086 = vadd.xlane.f32.xlu0 %v1085
    %v1087 = vpop.xlane.xlu0 %1086
    %v1088 = vsel %vm209, %v1084, 0.0
    %1089 = vadd.xlane.f32.xlu0 %v1088
    %v1090 = vpop.xlane.xlu0 %1089
    %v1091 = vmul.f32 %v1087, %v222
    %v1092 = vmul.f32 %v1090, %v222
    %v1093 = vsub.f32 %v1083, %v1091
    %v1094 = vsub.f32 %v1084, %v1092
    %v1095 = vmul.f32 %v1093, %v1093
    %v1096 = vmul.f32 %v1094, %v1094
    %v1097 = vsel %vm209, %v1095, 0.0
    %1098 = vadd.xlane.f32.xlu0 %v1097
    %v1099 = vpop.xlane.xlu0 %1098
    %v1100 = vsel %vm209, %v1096, 0.0
    %1101 = vadd.xlane.f32.xlu0 %v1100
    %v1102 = vpop.xlane.xlu0 %1101
    %v1103 = vmul.f32 %v1099, %v222
    %v1104 = vmul.f32 %v1102, %v222
    %v1105 = vadd.f32 %v1103, 1e-05
    %v1106 = vadd.f32 %v1104, 1e-05
    %v1107 = vrsqrt.pop %v1105
    %v1108 = vmul.f32 %v1107, %v1105
    %v1109 = vmul.f32 %v1108, %v1107
    %v1110 = vmul.f32 0.5, %v1109
    %v1111 = vsub.f32 1.5, %v1110
    %v1112 = vmul.f32 %v1107, %v1111
    %vm1113 = vweird.f32 %v1105
    %vm1114 = vweird.f32 %v1107
    %vm1115 = vmor %vm1113, %vm1114
    %v1116 = vsel %vm1115, %v1107, %v1112
    %v1117 = vrsqrt.pop %v1106
    %v1118 = vmul.f32 %v1117, %v1106
    %v1119 = vmul.f32 %v1118, %v1117
    %v1120 = vmul.f32 0.5, %v1119
    %v1121 = vsub.f32 1.5, %v1120
    %v1122 = vmul.f32 %v1117, %v1121
    %vm1123 = vweird.f32 %v1106
    %vm1124 = vweird.f32 %v1117
    %vm1125 = vmor %vm1123, %vm1124
    %v1126 = vsel %vm1125, %v1117, %v1122
    %v1127 = vmul.f32 %v1093, %v1116
    %v1128 = vmul.f32 %v1094, %v1126
    %v1129 = vperm.slane %v44, 4
    %v1130 = vmul.f32 %v1127, %v1129
    %v1131 = vmul.f32 %v1128, %v1129
    %v1132 = vperm.slane %v44, 5
    %v1133 = vadd.f32 %v1130, %v1132
    %v1134 = vadd.f32 %v1131, %v1132
    %v1135 = vperm.slane %v45, 3
    %v1137 = vsel %vm209, %v1133, 0
    %v1140 = vsel %vm209, %v1134, 0
    %1142 = vmatpush.msra.mxu0 0.0
    %1143 = vmatpush.msra.mxu0 0.0
    %1144 = vmatpush.msra.mxu0 0.0
    %1145 = vmatpush.msra.mxu0 0.0
    %1146 = vmatpush.msra.mxu0 0.0
    %1147 = vmatpush.msra.mxu0 0.0
    %1148 = vmatpush.msra.mxu0 0.0
    %1149 = vmatpush.msra.mxu0 0.0
    %1150 = vmatpush.msra.mxu0 0.0
    %1151 = vmatpush.msra.mxu0 0.0
    %1152 = vmatpush.msra.mxu0 0.0
    %1153 = vmatpush.msra.mxu0 0.0
    %1154 = vmatpush.msra.mxu0 %v43
    %1155 = vmatpush.msra.mxu0 %v40
    %1156 = vmatpush.msra.mxu0 %v37
    %1157 = vmatpush.msra.mxu0 %v34
    %1158 = vmatmul.f32.gmra.mxu0 %v1137
    %v1159 = vpop.f32.mrf.mxu0
    %v1160 = vadd.f32 %v1135, %v1159
    %1161 = vmatmul.f32.gmra.mxu0 %v1140
    %v1162 = vpop.f32.mrf.mxu0
    %v1163 = vadd.f32 %v1135, %v1162
    %1164 = vdwg.mxu0
    %v1165 = vmax.f32 %v1160, 0.0
    %v1166 = vmax.f32 %v1163, 0.0
    %v1167 = vld [vmem:[%s5] sm:$0xff]
    %v1168 = vld [vmem:[%s5 + $0x8] sm:$0xff]
    %v1169 = vld [vmem:[%s5 + $0x10] sm:$0xff]
    %v1170 = vld [vmem:[%s5 + $0x18] sm:$0xff]
    %v1171 = vld [vmem:[%s5 + $0x20] sm:$0xff]
    %v1172 = vld [vmem:[%s5 + $0x28] sm:$0xff]
    %v1173 = vld [vmem:[%s5 + $0x30] sm:$0xff]
    %v1174 = vld [vmem:[%s5 + $0x38] sm:$0xff]
    %v1175 = vperm.slane %v45, 4
    %vm1176 = vcmask 523264
    %v1178 = vsel %vm1176, %v1165, 0
    %v1181 = vsel %vm1176, %v1166, 0
    %1183 = vmatpush.msra.mxu0 0.0
    %1184 = vmatpush.msra.mxu0 0.0
    %1185 = vmatpush.msra.mxu0 0.0
    %1186 = vmatpush.msra.mxu0 0.0
    %1187 = vmatpush.msra.mxu0 0.0
    %1188 = vmatpush.msra.mxu0 0.0
    %1189 = vmatpush.msra.mxu0 0.0
    %1190 = vmatpush.msra.mxu0 0.0
    %1191 = vmatpush.msra.mxu0 %v1174
    %1192 = vmatpush.msra.mxu0 %v1173
    %1193 = vmatpush.msra.mxu0 %v1172
    %1194 = vmatpush.msra.mxu0 %v1171
    %1195 = vmatpush.msra.mxu0 %v1170
    %1196 = vmatpush.msra.mxu0 %v1169
    %1197 = vmatpush.msra.mxu0 %v1168
    %1198 = vmatpush.msra.mxu0 %v1167
    %1199 = vmatmul.f32.gmra.mxu0 %v1178
    %v1200 = vpop.f32.mrf.mxu0
    %v1201 = vadd.f32 %v1175, %v1200
    %1202 = vmatmul.f32.gmra.mxu0 %v1181
    %v1203 = vpop.f32.mrf.mxu0
    %v1204 = vadd.f32 %v1175, %v1203
    %1205 = vdwg.mxu0
    %v1206 = vadd.f32 %v1083, %v1201
    %v1207 = vadd.f32 %v1084, %v1204
    %1208 = vst.msk [vmem:[#allocation2] sm:$0xff] %vm209, %v1206
    %1209 = vst.msk [vmem:[#allocation2 + $0x8] sm:$0xff] %vm209, %v1207
    // Predicated region
    $region30: #{decoder_layer.1} parent=1 // pred_check
      _
    $region31: #{decoder_layer.1} parent=1 // pred_check_branch
      %1211 = sbr.rel (0) target = $region33
    $region32: #{decoder_layer.1} parent=1 // pred_region
      %1213 = vsyncadd [#allocation3], 0
      %s1214 = sshll.u32 [#allocation2], 4
      %s1215 = int_to_ptr.vmem [resolvable:$true] %s1214
      %s1216 = sshll.u32 %s7, 4
      %s1217 = int_to_ptr.hbm [resolvable:$true] %s1216
      %1222 = dma.vmem_to_hbm [thread:$0]  %s1215, 256, %s1217, [#allocation3], 128, 128, 8
    $region33: #{decoder_layer.1} parent=1 // pred_fallthru
      _
    // Predicated region
    $region34: #{decoder_layer.1} parent=1 // pred_check
      _
    $region35: #{decoder_layer.1} parent=1 // pred_check_branch
      %1224 = sbr.rel (0) target = $region37
    $region36: #{decoder_layer.1} parent=1 // pred_region
      %1226 = dma.done [#allocation3], 256
    $region37: #{decoder_layer.1} parent=1 // pred_fallthru
      _
    %1227 = vsyncpa [#allocation3], 1

</llo_original>
